<compile_context>
chip_gen: v5e
topology: v5e:2x2
jax: 0.10.0
libtpu: 0.0.40
codegen_flags: <defaults>
</compile_context>

<pallas_src>
import jax
import jax.numpy as jnp
from jax import lax
from jax.experimental import pallas as pl
from jax.experimental.pallas import tpu as pltpu


MXU_DTYPE = jnp.bfloat16            # set to jnp.float32 for exact f32 numerics
_VMEM_LIMIT_BYTES = 32 * 1024 * 1024


def _round_up(n, m):
    return (n + m - 1) // m * m


def _tile_m(m):
    """Pick the lane tile TM and padded extent for the M = B*H*W axis."""
    mpad = _round_up(max(m, 1), 128)
    if mpad <= 1024:
        return mpad, mpad            # one lane-dense tile
    return 512, _round_up(m, 512)    # tiled + pipelined for large batch


# ----------------------------- Pallas kernels ------------------------------

def _conv_abs_pool_kernel(p_ref, w_ref, b_ref, o_ref):
    """Fused conv3x3 (im2col matmul) + bias + |.| + 2x2 max-pool.

    p: (4, K, TM)  four pool-quadrant im2col slabs (lane-dense columns)
    w: (Cout, K)   conv weights as a matrix,   b: (Cout, 1) bias
    o: (Cout, TM)  = max_q | w @ p[q] + b |
    """
    w = w_ref[...]
    b = b_ref[...]

    def tap(q):
        return jnp.abs(jnp.dot(w, p_ref[q], preferred_element_type=jnp.float32) + b)

    out = jnp.maximum(jnp.maximum(tap(0), tap(1)), jnp.maximum(tap(2), tap(3)))
    o_ref[...] = out.astype(o_ref.dtype)


def _conv_abs_pool_linear_kernel(p_ref, w_ref, b_ref, wl_ref, bl_ref, o_ref):
    """Last conv stage fused with flatten + Linear head (columns = batch items)."""
    w = w_ref[...]
    b = b_ref[...]

    def tap(q):
        return jnp.abs(jnp.dot(w, p_ref[q], preferred_element_type=jnp.float32) + b)

    feat = jnp.maximum(jnp.maximum(tap(0), tap(1)), jnp.maximum(tap(2), tap(3)))
    logits = jnp.dot(wl_ref[...], feat.astype(wl_ref.dtype),
                     preferred_element_type=jnp.float32) + bl_ref[...]
    o_ref[...] = logits.astype(o_ref.dtype)


def _fused_conv_stage(p, wm, bias, tm, out_dtype):
    _, k8, mpad = p.shape
    cout = wm.shape[0]
    return pl.pallas_call(
        _conv_abs_pool_kernel,
        out_shape=jax.ShapeDtypeStruct((cout, mpad), out_dtype),
        grid=(mpad // tm,),
        in_specs=[
            pl.BlockSpec((4, k8, tm), lambda m: (0, 0, m)),
            pl.BlockSpec((cout, k8), lambda m: (0, 0)),
            pl.BlockSpec((cout, 1), lambda m: (0, 0)),
        ],
        out_specs=pl.BlockSpec((cout, tm), lambda m: (0, m)),
        compiler_params=pltpu.CompilerParams(
            dimension_semantics=("parallel",),
            vmem_limit_bytes=_VMEM_LIMIT_BYTES),
    )(p, wm, bias)


def _fused_final_stage(p, wm, bias, wl, bl, tm):
    _, k8, mpad = p.shape
    cout = wm.shape[0]
    ncls_pad = wl.shape[0]
    return pl.pallas_call(
        _conv_abs_pool_linear_kernel,
        out_shape=jax.ShapeDtypeStruct((ncls_pad, mpad), jnp.float32),
        grid=(mpad // tm,),
        in_specs=[
            pl.BlockSpec((4, k8, tm), lambda m: (0, 0, m)),
            pl.BlockSpec((cout, k8), lambda m: (0, 0)),
            pl.BlockSpec((cout, 1), lambda m: (0, 0)),
            pl.BlockSpec((ncls_pad, cout), lambda m: (0, 0)),
            pl.BlockSpec((ncls_pad, 1), lambda m: (0, 0)),
        ],
        out_specs=pl.BlockSpec((ncls_pad, tm), lambda m: (0, m)),
        compiler_params=pltpu.CompilerParams(
            dimension_semantics=("parallel",),
            vmem_limit_bytes=_VMEM_LIMIT_BYTES),
    )(p, wm, bias, wl, bl)


# ----------------------------- layout plumbing ------------------------------

def _pool_quadrant_patches(act, hp, wp):
    """act: (C, B, H, W) -> (4, C*9, B*hp*wp) pool-quadrant im2col matrices.

    P[q, ci*9 + dy*3 + dx, b*hp*wp + i*wp + j] = act[ci, b, qy+dy+2i, qx+dx+2j].
    """
    # TODO(synk): move the tap/quadrant extraction in-kernel (pl.ANY + in-kernel slicing) to kill the ~9x im2col HBM expansion at very large batch.
    c, b, _, _ = act.shape
    quads = []
    for qy in (0, 1):
        for qx in (0, 1):
            taps = []
            for dy in range(3):
                for dx in range(3):
                    y0, x0 = qy + dy, qx + dx
                    taps.append(lax.slice(
                        act,
                        (0, 0, y0, x0),
                        (c, b, y0 + 2 * (hp - 1) + 1, x0 + 2 * (wp - 1) + 1),
                        (1, 1, 2, 2)))                     # (C, B, hp, wp)
            pq = jnp.stack(taps, axis=1)                   # (C, 9, B, hp, wp)
            quads.append(pq.reshape(c * 9, b * hp * wp))
    return jnp.stack(quads, axis=0)                        # (4, C*9, M)


def _prep_conv(w, bias, cin_pad):
    """PyTorch (Cout, Cin, 3, 3) conv weights -> (Cout_pad, K_pad) matmul form.

    Cout and K = cin_pad*9 are zero-padded to multiples of 8; padded rows/cols
    are exact zeros so padded channels stay zero and never need slicing.
    """
    cout, cin = int(w.shape[0]), int(w.shape[1])
    cout_pad = _round_up(cout, 8)
    wfull = jnp.zeros((cout_pad, cin_pad, 3, 3), jnp.float32)
    wfull = wfull.at[:cout, :cin].set(w.astype(jnp.float32))
    k = cin_pad * 9
    k8 = _round_up(k, 8)
    wm = jnp.pad(wfull.reshape(cout_pad, k), ((0, 0), (0, k8 - k)))
    bp = jnp.zeros((cout_pad, 1), jnp.float32).at[:cout, 0].set(bias.astype(jnp.float32))
    return wm.astype(MXU_DTYPE), bp, cout_pad, k8


def _prep_linear(w, bias, cin_pad):
    cout, cin = int(w.shape[0]), int(w.shape[1])
    cout_pad = _round_up(cout, 8)
    wm = jnp.zeros((cout_pad, cin_pad), jnp.float32).at[:cout, :cin].set(
        w.astype(jnp.float32))
    bp = jnp.zeros((cout_pad, 1), jnp.float32).at[:cout, 0].set(bias.astype(jnp.float32))
    return wm.astype(MXU_DTYPE), bp


def _run_conv_stage(act, wm, bias, k8):
    c, b, h, w = act.shape
    hp, wp = (h - 2) // 2, (w - 2) // 2
    m = b * hp * wp
    tm, mpad = _tile_m(m)
    p = _pool_quadrant_patches(act, hp, wp)
    p = jnp.pad(p, ((0, 0), (0, k8 - c * 9), (0, mpad - m))).astype(MXU_DTYPE)
    out = _fused_conv_stage(p, wm, bias, tm, MXU_DTYPE)       # (Cout_pad, Mpad)
    return out[:, :m].reshape(wm.shape[0], b, hp, wp)


def _run_final_stage(act, wm, bias, k8, wl, bl, nclass, batch):
    c, b, h, w = act.shape
    hp, wp = (h - 2) // 2, (w - 2) // 2                       # -> 1, 1
    m = b * hp * wp
    tm, mpad = _tile_m(m)
    p = _pool_quadrant_patches(act, hp, wp)
    p = jnp.pad(p, ((0, 0), (0, k8 - c * 9), (0, mpad - m))).astype(MXU_DTYPE)
    logits = _fused_final_stage(p, wm, bias, wl, bl, tm)      # (ncls_pad, Mpad) f32
    return logits[:nclass, :batch].T                          # (B, nclass)


# ----------------------------- forward pass ---------------------------------

def net1_activate_forward(params, x_nchw):
    batch = x_nchw.shape[0]
    # NCHW -> (C, B, H, W): channels on sublanes, batch*spatial lane-dense.
    act = jnp.transpose(x_nchw, (1, 0, 2, 3)).astype(MXU_DTYPE)

    wm1, b1, c1p, k1 = _prep_conv(params["w1"], params["b1"], cin_pad=act.shape[0])
    wm2, b2, c2p, k2 = _prep_conv(params["w2"], params["b2"], cin_pad=c1p)
    wm3, b3, c3p, k3 = _prep_conv(params["w3"], params["b3"], cin_pad=c2p)
    wl, bl = _prep_linear(params["wl"], params["bl"], cin_pad=c3p)
    nclass = int(params["wl"].shape[0])

    act = _run_conv_stage(act, wm1, b1, k1)    # (16, B, 13, 13)
    act = _run_conv_stage(act, wm2, b2, k2)    # (24, B,  5,  5)
    return _run_final_stage(act, wm3, b3, k3, wl, bl, nclass, batch)   # (B, 10)


# ----------------------------- f32 reference --------------------------------

def _reference_forward(params, x):
    x = x.astype(jnp.float32)

    def conv(x, w, b):
        y = lax.conv_general_dilated(
            x, w.astype(jnp.float32), window_strides=(1, 1), padding="VALID",
            dimension_numbers=("NCHW", "OIHW", "NCHW"))
        return y + b.astype(jnp.float32).reshape(1, -1, 1, 1)

    def pool(x):
        return lax.reduce_window(x, -jnp.inf, lax.max,
                                 (1, 1, 2, 2), (1, 1, 2, 2), "VALID")

    x = pool(jnp.abs(conv(x, params["w1"], params["b1"])))
    x = pool(jnp.abs(conv(x, params["w2"], params["b2"])))
    x = pool(jnp.abs(conv(x, params["w3"], params["b3"])))
    x = x.reshape(x.shape[0], -1)
    return x @ params["wl"].T.astype(jnp.float32) + params["bl"].astype(jnp.float32)


# ----------------------------- params ---------------------------------------

def init_params(key):
    ks = jax.random.split(key, 8)

    def conv_p(kw, kb, cout, cin):
        w = jax.random.normal(kw, (cout, cin, 3, 3), jnp.float32) * 0.1
        b = jax.random.normal(kb, (cout,), jnp.float32) * 0.1
        return w, b

    w1, b1 = conv_p(ks[0], ks[1], 10, 1)
    w2, b2 = conv_p(ks[2], ks[3], 18, 10)
    w3, b3 = conv_p(ks[4], ks[5], 27, 18)
    wl = jax.random.normal(ks[6], (10, 27), jnp.float32) * 0.1
    bl = jax.random.normal(ks[7], (10,), jnp.float32) * 0.1
    return dict(w1=w1, b1=b1, w2=w2, b2=b2, w3=w3, b3=b3, wl=wl, bl=bl)


# ----------------------------- main ------------------------------------------

if __name__ == "__main__":
    key = jax.random.PRNGKey(0)
    pkey, xkey = jax.random.split(key)
    params = init_params(pkey)
    # 1-channel 28x28 images (Fashion-MNIST geometry the module implies), batch=2.
    x = jax.random.normal(xkey, (2, 1, 28, 28), jnp.float32)

    out = jax.jit(net1_activate_forward)(params, x)
    out = jax.block_until_ready(out)
    assert out.shape == (2, 10), out.shape

    ref = _reference_forward(params, x)
    tol = 5e-2 if MXU_DTYPE == jnp.bfloat16 else 1e-4
    assert float(jnp.max(jnp.abs(out - ref))) < tol

    print("KERNEL_OK")
</pallas_src>

<mosaic_0001>
module attributes {stable_mosaic.version = 11 : i64} {
  func.func @_conv_abs_pool_kernel(%arg0: i32, %arg1: memref<4x16x384xbf16, #tpu.memory_space<vmem>>, %arg2: memref<16x16xbf16, #tpu.memory_space<vmem>>, %arg3: memref<16x1xf32, #tpu.memory_space<vmem>>, %arg4: memref<16x384xbf16, #tpu.memory_space<vmem>>) attributes {dimension_semantics = [#tpu.dimension_semantics<parallel>], iteration_bounds = array<i64: 1>, scalar_prefetch = 0 : i64, scratch_operands = 0 : i64, tpu.core_type = #tpu.core_type<tc>, window_params = [{transform_indices = @transform_0, window_bounds = array<i64: 4, 16, 384>}, {pipeline_mode = #tpu.pipeline_mode<synchronous>, transform_indices = @transform_1, window_bounds = array<i64: 16, 16>}, {pipeline_mode = #tpu.pipeline_mode<synchronous>, transform_indices = @transform_2, window_bounds = array<i64: 16, 1>}, {transform_indices = @transform_3, window_bounds = array<i64: 16, 384>}]} {
    %c0 = arith.constant 0 : index
    %c0_0 = arith.constant 0 : index
    %0 = vector.load %arg2[%c0, %c0_0] : memref<16x16xbf16, #tpu.memory_space<vmem>>, vector<16x16xbf16>
    %c0_1 = arith.constant 0 : index
    %c0_2 = arith.constant 0 : index
    %1 = vector.load %arg3[%c0_1, %c0_2] : memref<16x1xf32, #tpu.memory_space<vmem>>, vector<16x1xf32>
    %c0_3 = arith.constant 0 : index
    %c0_4 = arith.constant 0 : index
    %c0_5 = arith.constant 0 : index
    %2 = vector.load %arg1[%c0_3, %c0_4, %c0_5] : memref<4x16x384xbf16, #tpu.memory_space<vmem>>, vector<1x16x384xbf16>
    %3 = vector.shape_cast %2 : vector<1x16x384xbf16> to vector<16x384xbf16>
    %cst = arith.constant dense<0.000000e+00> : vector<16x384xf32>
    %4 = tpu.matmul %0, %3, %cst {dimension_numbers = #tpu.dot_dimension_numbers<[1], [0], [0], [1], [0, 0, 1, 1], [], []>} : vector<16x16xbf16>, vector<16x384xbf16>, vector<16x384xf32> -> vector<16x384xf32>
    %5 = vector.broadcast %1 : vector<16x1xf32> to vector<16x384xf32>
    %6 = arith.addf %4, %5 : vector<16x384xf32>
    %7 = math.absf %6 : vector<16x384xf32>
    %c1 = arith.constant 1 : index
    %c0_6 = arith.constant 0 : index
    %c0_7 = arith.constant 0 : index
    %8 = vector.load %arg1[%c1, %c0_6, %c0_7] : memref<4x16x384xbf16, #tpu.memory_space<vmem>>, vector<1x16x384xbf16>
    %9 = vector.shape_cast %8 : vector<1x16x384xbf16> to vector<16x384xbf16>
    %cst_8 = arith.constant dense<0.000000e+00> : vector<16x384xf32>
    %10 = tpu.matmul %0, %9, %cst_8 {dimension_numbers = #tpu.dot_dimension_numbers<[1], [0], [0], [1], [0, 0, 1, 1], [], []>} : vector<16x16xbf16>, vector<16x384xbf16>, vector<16x384xf32> -> vector<16x384xf32>
    %11 = vector.broadcast %1 : vector<16x1xf32> to vector<16x384xf32>
    %12 = arith.addf %10, %11 : vector<16x384xf32>
    %13 = math.absf %12 : vector<16x384xf32>
    %14 = arith.maximumf %7, %13 : vector<16x384xf32>
    %c2 = arith.constant 2 : index
    %c0_9 = arith.constant 0 : index
    %c0_10 = arith.constant 0 : index
    %15 = vector.load %arg1[%c2, %c0_9, %c0_10] : memref<4x16x384xbf16, #tpu.memory_space<vmem>>, vector<1x16x384xbf16>
    %16 = vector.shape_cast %15 : vector<1x16x384xbf16> to vector<16x384xbf16>
    %cst_11 = arith.constant dense<0.000000e+00> : vector<16x384xf32>
    %17 = tpu.matmul %0, %16, %cst_11 {dimension_numbers = #tpu.dot_dimension_numbers<[1], [0], [0], [1], [0, 0, 1, 1], [], []>} : vector<16x16xbf16>, vector<16x384xbf16>, vector<16x384xf32> -> vector<16x384xf32>
    %18 = vector.broadcast %1 : vector<16x1xf32> to vector<16x384xf32>
    %19 = arith.addf %17, %18 : vector<16x384xf32>
    %20 = math.absf %19 : vector<16x384xf32>
    %c3 = arith.constant 3 : index
    %c0_12 = arith.constant 0 : index
    %c0_13 = arith.constant 0 : index
    %21 = vector.load %arg1[%c3, %c0_12, %c0_13] : memref<4x16x384xbf16, #tpu.memory_space<vmem>>, vector<1x16x384xbf16>
    %22 = vector.shape_cast %21 : vector<1x16x384xbf16> to vector<16x384xbf16>
    %cst_14 = arith.constant dense<0.000000e+00> : vector<16x384xf32>
    %23 = tpu.matmul %0, %22, %cst_14 {dimension_numbers = #tpu.dot_dimension_numbers<[1], [0], [0], [1], [0, 0, 1, 1], [], []>} : vector<16x16xbf16>, vector<16x384xbf16>, vector<16x384xf32> -> vector<16x384xf32>
    %24 = vector.broadcast %1 : vector<16x1xf32> to vector<16x384xf32>
    %25 = arith.addf %23, %24 : vector<16x384xf32>
    %26 = math.absf %25 : vector<16x384xf32>
    %27 = arith.maximumf %20, %26 : vector<16x384xf32>
    %28 = arith.maximumf %14, %27 : vector<16x384xf32>
    %29 = arith.truncf %28 : vector<16x384xf32> to vector<16x384xbf16>
    %c0_15 = arith.constant 0 : index
    %c0_16 = arith.constant 0 : index
    %30 = vector.load %arg4[%c0_15, %c0_16] : memref<16x384xbf16, #tpu.memory_space<vmem>>, vector<16x384xbf16>
    tpu.vector_store %arg4[%c0_15, %c0_16], %29 {strides = array<i32>} : memref<16x384xbf16, #tpu.memory_space<vmem>>, vector<16x384xbf16>,
    return
  }
  func.func @transform_0(%arg0: i32) -> (i32, i32, i32) {
    %c0_i32 = arith.constant 0 : i32
    %c0_i32_0 = arith.constant 0 : i32
    %c0_i32_1 = arith.constant 0 : i32
    return %c0_i32, %c0_i32_0, %arg0 : i32, i32, i32
  }
  func.func @transform_1(%arg0: i32) -> (i32, i32) {
    %c0_i32 = arith.constant 0 : i32
    %c0_i32_0 = arith.constant 0 : i32
    %c0_i32_1 = arith.constant 0 : i32
    return %c0_i32, %c0_i32_0 : i32, i32
  }
  func.func @transform_2(%arg0: i32) -> (i32, i32) {
    %c0_i32 = arith.constant 0 : i32
    %c0_i32_0 = arith.constant 0 : i32
    %c0_i32_1 = arith.constant 0 : i32
    return %c0_i32, %c0_i32_0 : i32, i32
  }
  func.func @transform_3(%arg0: i32) -> (i32, i32) {
    %c0_i32 = arith.constant 0 : i32
    %c0_i32_0 = arith.constant 0 : i32
    return %c0_i32, %arg0 : i32, i32
  }
}

module attributes {stable_mosaic.version = 11 : i64} {
  func.func @_conv_abs_pool_kernel(%arg0: i32, %arg1: memref<4x144x128xbf16, #tpu.memory_space<vmem>>, %arg2: memref<24x144xbf16, #tpu.memory_space<vmem>>, %arg3: memref<24x1xf32, #tpu.memory_space<vmem>>, %arg4: memref<24x128xbf16, #tpu.memory_space<vmem>>) attributes {dimension_semantics = [#tpu.dimension_semantics<parallel>], iteration_bounds = array<i64: 1>, scalar_prefetch = 0 : i64, scratch_operands = 0 : i64, tpu.core_type = #tpu.core_type<tc>, window_params = [{transform_indices = @transform_0, window_bounds = array<i64: 4, 144, 128>}, {pipeline_mode = #tpu.pipeline_mode<synchronous>, transform_indices = @transform_1, window_bounds = array<i64: 24, 144>}, {pipeline_mode = #tpu.pipeline_mode<synchronous>, transform_indices = @transform_2, window_bounds = array<i64: 24, 1>}, {transform_indices = @transform_3, window_bounds = array<i64: 24, 128>}]} {
    %c0 = arith.constant 0 : index
    %c0_0 = arith.constant 0 : index
    %0 = vector.load %arg2[%c0, %c0_0] : memref<24x144xbf16, #tpu.memory_space<vmem>>, vector<24x144xbf16>
    %c0_1 = arith.constant 0 : index
    %c0_2 = arith.constant 0 : index
    %1 = vector.load %arg3[%c0_1, %c0_2] : memref<24x1xf32, #tpu.memory_space<vmem>>, vector<24x1xf32>
    %c0_3 = arith.constant 0 : index
    %c0_4 = arith.constant 0 : index
    %c0_5 = arith.constant 0 : index
    %2 = vector.load %arg1[%c0_3, %c0_4, %c0_5] : memref<4x144x128xbf16, #tpu.memory_space<vmem>>, vector<1x144x128xbf16>
    %3 = vector.shape_cast %2 : vector<1x144x128xbf16> to vector<144x128xbf16>
    %cst = arith.constant dense<0.000000e+00> : vector<24x128xf32>
    %4 = tpu.matmul %0, %3, %cst {dimension_numbers = #tpu.dot_dimension_numbers<[1], [0], [0], [1], [0, 0, 1, 1], [], []>} : vector<24x144xbf16>, vector<144x128xbf16>, vector<24x128xf32> -> vector<24x128xf32>
    %5 = vector.broadcast %1 : vector<24x1xf32> to vector<24x128xf32>
    %6 = arith.addf %4, %5 : vector<24x128xf32>
    %7 = math.absf %6 : vector<24x128xf32>
    %c1 = arith.constant 1 : index
    %c0_6 = arith.constant 0 : index
    %c0_7 = arith.constant 0 : index
    %8 = vector.load %arg1[%c1, %c0_6, %c0_7] : memref<4x144x128xbf16, #tpu.memory_space<vmem>>, vector<1x144x128xbf16>
    %9 = vector.shape_cast %8 : vector<1x144x128xbf16> to vector<144x128xbf16>
    %cst_8 = arith.constant dense<0.000000e+00> : vector<24x128xf32>
    %10 = tpu.matmul %0, %9, %cst_8 {dimension_numbers = #tpu.dot_dimension_numbers<[1], [0], [0], [1], [0, 0, 1, 1], [], []>} : vector<24x144xbf16>, vector<144x128xbf16>, vector<24x128xf32> -> vector<24x128xf32>
    %11 = vector.broadcast %1 : vector<24x1xf32> to vector<24x128xf32>
    %12 = arith.addf %10, %11 : vector<24x128xf32>
    %13 = math.absf %12 : vector<24x128xf32>
    %14 = arith.maximumf %7, %13 : vector<24x128xf32>
    %c2 = arith.constant 2 : index
    %c0_9 = arith.constant 0 : index
    %c0_10 = arith.constant 0 : index
    %15 = vector.load %arg1[%c2, %c0_9, %c0_10] : memref<4x144x128xbf16, #tpu.memory_space<vmem>>, vector<1x144x128xbf16>
    %16 = vector.shape_cast %15 : vector<1x144x128xbf16> to vector<144x128xbf16>
    %cst_11 = arith.constant dense<0.000000e+00> : vector<24x128xf32>
    %17 = tpu.matmul %0, %16, %cst_11 {dimension_numbers = #tpu.dot_dimension_numbers<[1], [0], [0], [1], [0, 0, 1, 1], [], []>} : vector<24x144xbf16>, vector<144x128xbf16>, vector<24x128xf32> -> vector<24x128xf32>
    %18 = vector.broadcast %1 : vector<24x1xf32> to vector<24x128xf32>
    %19 = arith.addf %17, %18 : vector<24x128xf32>
    %20 = math.absf %19 : vector<24x128xf32>
    %c3 = arith.constant 3 : index
    %c0_12 = arith.constant 0 : index
    %c0_13 = arith.constant 0 : index
    %21 = vector.load %arg1[%c3, %c0_12, %c0_13] : memref<4x144x128xbf16, #tpu.memory_space<vmem>>, vector<1x144x128xbf16>
    %22 = vector.shape_cast %21 : vector<1x144x128xbf16> to vector<144x128xbf16>
    %cst_14 = arith.constant dense<0.000000e+00> : vector<24x128xf32>
    %23 = tpu.matmul %0, %22, %cst_14 {dimension_numbers = #tpu.dot_dimension_numbers<[1], [0], [0], [1], [0, 0, 1, 1], [], []>} : vector<24x144xbf16>, vector<144x128xbf16>, vector<24x128xf32> -> vector<24x128xf32>
    %24 = vector.broadcast %1 : vector<24x1xf32> to vector<24x128xf32>
    %25 = arith.addf %23, %24 : vector<24x128xf32>
    %26 = math.absf %25 : vector<24x128xf32>
    %27 = arith.maximumf %20, %26 : vector<24x128xf32>
    %28 = arith.maximumf %14, %27 : vector<24x128xf32>
    %29 = arith.truncf %28 : vector<24x128xf32> to vector<24x128xbf16>
    %c0_15 = arith.constant 0 : index
    %c0_16 = arith.constant 0 : index
    %30 = vector.load %arg4[%c0_15, %c0_16] : memref<24x128xbf16, #tpu.memory_space<vmem>>, vector<24x128xbf16>
    tpu.vector_store %arg4[%c0_15, %c0_16], %29 {strides = array<i32>} : memref<24x128xbf16, #tpu.memory_space<vmem>>, vector<24x128xbf16>,
    return
  }
  func.func @transform_0(%arg0: i32) -> (i32, i32, i32) {
    %c0_i32 = arith.constant 0 : i32
    %c0_i32_0 = arith.constant 0 : i32
    %c0_i32_1 = arith.constant 0 : i32
    return %c0_i32, %c0_i32_0, %arg0 : i32, i32, i32
  }
  func.func @transform_1(%arg0: i32) -> (i32, i32) {
    %c0_i32 = arith.constant 0 : i32
    %c0_i32_0 = arith.constant 0 : i32
    %c0_i32_1 = arith.constant 0 : i32
    return %c0_i32, %c0_i32_0 : i32, i32
  }
  func.func @transform_2(%arg0: i32) -> (i32, i32) {
    %c0_i32 = arith.constant 0 : i32
    %c0_i32_0 = arith.constant 0 : i32
    %c0_i32_1 = arith.constant 0 : i32
    return %c0_i32, %c0_i32_0 : i32, i32
  }
  func.func @transform_3(%arg0: i32) -> (i32, i32) {
    %c0_i32 = arith.constant 0 : i32
    %c0_i32_0 = arith.constant 0 : i32
    return %c0_i32, %arg0 : i32, i32
  }
}

module attributes {stable_mosaic.version = 11 : i64} {
  func.func @_conv_abs_pool_linear_kernel(%arg0: i32, %arg1: memref<4x216x128xbf16, #tpu.memory_space<vmem>>, %arg2: memref<32x216xbf16, #tpu.memory_space<vmem>>, %arg3: memref<32x1xf32, #tpu.memory_space<vmem>>, %arg4: memref<16x32xbf16, #tpu.memory_space<vmem>>, %arg5: memref<16x1xf32, #tpu.memory_space<vmem>>, %arg6: memref<16x128xf32, #tpu.memory_space<vmem>>) attributes {dimension_semantics = [#tpu.dimension_semantics<parallel>], iteration_bounds = array<i64: 1>, scalar_prefetch = 0 : i64, scratch_operands = 0 : i64, tpu.core_type = #tpu.core_type<tc>, window_params = [{transform_indices = @transform_0, window_bounds = array<i64: 4, 216, 128>}, {pipeline_mode = #tpu.pipeline_mode<synchronous>, transform_indices = @transform_1, window_bounds = array<i64: 32, 216>}, {pipeline_mode = #tpu.pipeline_mode<synchronous>, transform_indices = @transform_2, window_bounds = array<i64: 32, 1>}, {pipeline_mode = #tpu.pipeline_mode<synchronous>, transform_indices = @transform_3, window_bounds = array<i64: 16, 32>}, {pipeline_mode = #tpu.pipeline_mode<synchronous>, transform_indices = @transform_4, window_bounds = array<i64: 16, 1>}, {transform_indices = @transform_5, window_bounds = array<i64: 16, 128>}]} {
    %c0 = arith.constant 0 : index
    %c0_0 = arith.constant 0 : index
    %0 = vector.load %arg2[%c0, %c0_0] : memref<32x216xbf16, #tpu.memory_space<vmem>>, vector<32x216xbf16>
    %c0_1 = arith.constant 0 : index
    %c0_2 = arith.constant 0 : index
    %1 = vector.load %arg3[%c0_1, %c0_2] : memref<32x1xf32, #tpu.memory_space<vmem>>, vector<32x1xf32>
    %c0_3 = arith.constant 0 : index
    %c0_4 = arith.constant 0 : index
    %c0_5 = arith.constant 0 : index
    %2 = vector.load %arg1[%c0_3, %c0_4, %c0_5] : memref<4x216x128xbf16, #tpu.memory_space<vmem>>, vector<1x216x128xbf16>
    %3 = vector.shape_cast %2 : vector<1x216x128xbf16> to vector<216x128xbf16>
    %cst = arith.constant dense<0.000000e+00> : vector<32x128xf32>
    %4 = tpu.matmul %0, %3, %cst {dimension_numbers = #tpu.dot_dimension_numbers<[1], [0], [0], [1], [0, 0, 1, 1], [], []>} : vector<32x216xbf16>, vector<216x128xbf16>, vector<32x128xf32> -> vector<32x128xf32>
    %5 = vector.broadcast %1 : vector<32x1xf32> to vector<32x128xf32>
    %6 = arith.addf %4, %5 : vector<32x128xf32>
    %7 = math.absf %6 : vector<32x128xf32>
    %c1 = arith.constant 1 : index
    %c0_6 = arith.constant 0 : index
    %c0_7 = arith.constant 0 : index
    %8 = vector.load %arg1[%c1, %c0_6, %c0_7] : memref<4x216x128xbf16, #tpu.memory_space<vmem>>, vector<1x216x128xbf16>
    %9 = vector.shape_cast %8 : vector<1x216x128xbf16> to vector<216x128xbf16>
    %cst_8 = arith.constant dense<0.000000e+00> : vector<32x128xf32>
    %10 = tpu.matmul %0, %9, %cst_8 {dimension_numbers = #tpu.dot_dimension_numbers<[1], [0], [0], [1], [0, 0, 1, 1], [], []>} : vector<32x216xbf16>, vector<216x128xbf16>, vector<32x128xf32> -> vector<32x128xf32>
    %11 = vector.broadcast %1 : vector<32x1xf32> to vector<32x128xf32>
    %12 = arith.addf %10, %11 : vector<32x128xf32>
    %13 = math.absf %12 : vector<32x128xf32>
    %14 = arith.maximumf %7, %13 : vector<32x128xf32>
    %c2 = arith.constant 2 : index
    %c0_9 = arith.constant 0 : index
    %c0_10 = arith.constant 0 : index
    %15 = vector.load %arg1[%c2, %c0_9, %c0_10] : memref<4x216x128xbf16, #tpu.memory_space<vmem>>, vector<1x216x128xbf16>
    %16 = vector.shape_cast %15 : vector<1x216x128xbf16> to vector<216x128xbf16>
    %cst_11 = arith.constant dense<0.000000e+00> : vector<32x128xf32>
    %17 = tpu.matmul %0, %16, %cst_11 {dimension_numbers = #tpu.dot_dimension_numbers<[1], [0], [0], [1], [0, 0, 1, 1], [], []>} : vector<32x216xbf16>, vector<216x128xbf16>, vector<32x128xf32> -> vector<32x128xf32>
    %18 = vector.broadcast %1 : vector<32x1xf32> to vector<32x128xf32>
    %19 = arith.addf %17, %18 : vector<32x128xf32>
    %20 = math.absf %19 : vector<32x128xf32>
    %c3 = arith.constant 3 : index
    %c0_12 = arith.constant 0 : index
    %c0_13 = arith.constant 0 : index
    %21 = vector.load %arg1[%c3, %c0_12, %c0_13] : memref<4x216x128xbf16, #tpu.memory_space<vmem>>, vector<1x216x128xbf16>
    %22 = vector.shape_cast %21 : vector<1x216x128xbf16> to vector<216x128xbf16>
    %cst_14 = arith.constant dense<0.000000e+00> : vector<32x128xf32>
    %23 = tpu.matmul %0, %22, %cst_14 {dimension_numbers = #tpu.dot_dimension_numbers<[1], [0], [0], [1], [0, 0, 1, 1], [], []>} : vector<32x216xbf16>, vector<216x128xbf16>, vector<32x128xf32> -> vector<32x128xf32>
    %24 = vector.broadcast %1 : vector<32x1xf32> to vector<32x128xf32>
    %25 = arith.addf %23, %24 : vector<32x128xf32>
    %26 = math.absf %25 : vector<32x128xf32>
    %27 = arith.maximumf %20, %26 : vector<32x128xf32>
    %28 = arith.maximumf %14, %27 : vector<32x128xf32>
    %c0_15 = arith.constant 0 : index
    %c0_16 = arith.constant 0 : index
    %29 = vector.load %arg4[%c0_15, %c0_16] : memref<16x32xbf16, #tpu.memory_space<vmem>>, vector<16x32xbf16>
    %30 = arith.truncf %28 : vector<32x128xf32> to vector<32x128xbf16>
    %cst_17 = arith.constant dense<0.000000e+00> : vector<16x128xf32>
    %31 = tpu.matmul %29, %30, %cst_17 {dimension_numbers = #tpu.dot_dimension_numbers<[1], [0], [0], [1], [0, 0, 1, 1], [], []>} : vector<16x32xbf16>, vector<32x128xbf16>, vector<16x128xf32> -> vector<16x128xf32>
    %c0_18 = arith.constant 0 : index
    %c0_19 = arith.constant 0 : index
    %32 = vector.load %arg5[%c0_18, %c0_19] : memref<16x1xf32, #tpu.memory_space<vmem>>, vector<16x1xf32>
    %33 = vector.broadcast %32 : vector<16x1xf32> to vector<16x128xf32>
    %34 = arith.addf %31, %33 : vector<16x128xf32>
    %c0_20 = arith.constant 0 : index
    %c0_21 = arith.constant 0 : index
    %35 = vector.load %arg6[%c0_20, %c0_21] : memref<16x128xf32, #tpu.memory_space<vmem>>, vector<16x128xf32>
    tpu.vector_store %arg6[%c0_20, %c0_21], %34 {strides = array<i32>} : memref<16x128xf32, #tpu.memory_space<vmem>>, vector<16x128xf32>,
    return
  }
  func.func @transform_0(%arg0: i32) -> (i32, i32, i32) {
    %c0_i32 = arith.constant 0 : i32
    %c0_i32_0 = arith.constant 0 : i32
    %c0_i32_1 = arith.constant 0 : i32
    return %c0_i32, %c0_i32_0, %arg0 : i32, i32, i32
  }
  func.func @transform_1(%arg0: i32) -> (i32, i32) {
    %c0_i32 = arith.constant 0 : i32
    %c0_i32_0 = arith.constant 0 : i32
    %c0_i32_1 = arith.constant 0 : i32
    return %c0_i32, %c0_i32_0 : i32, i32
  }
  func.func @transform_2(%arg0: i32) -> (i32, i32) {
    %c0_i32 = arith.constant 0 : i32
    %c0_i32_0 = arith.constant 0 : i32
    %c0_i32_1 = arith.constant 0 : i32
    return %c0_i32, %c0_i32_0 : i32, i32
  }
  func.func @transform_3(%arg0: i32) -> (i32, i32) {
    %c0_i32 = arith.constant 0 : i32
    %c0_i32_0 = arith.constant 0 : i32
    %c0_i32_1 = arith.constant 0 : i32
    return %c0_i32, %c0_i32_0 : i32, i32
  }
  func.func @transform_4(%arg0: i32) -> (i32, i32) {
    %c0_i32 = arith.constant 0 : i32
    %c0_i32_0 = arith.constant 0 : i32
    %c0_i32_1 = arith.constant 0 : i32
    return %c0_i32, %c0_i32_0 : i32, i32
  }
  func.func @transform_5(%arg0: i32) -> (i32, i32) {
    %c0_i32 = arith.constant 0 : i32
    %c0_i32_0 = arith.constant 0 : i32
    return %c0_i32, %arg0 : i32, i32
  }
}

</mosaic_0001>

<llo_original>
// kernel: net1_activate_forward.3
$region0: #{net1_activate_forward.3}
  #allocation0 [shape = 'u32[]', space=smem, size = 0x4, offset = 0x4, fixed_abs, tag = 'smem constant byte address 0x4 - core index']
  #allocation1 [shape = 'u32[72,128]{1,0:T(1,128)}', space=vmem, size = 0x9000, scoped, tag = 'internal scratch']
  %s0 = inlined_call_operand.vmem [shape: bf16[4,16,384], index: 0, kind: input, shape index: {}]
  %s1 = inlined_call_operand.vmem [shape: bf16[16,16], index: 1, kind: input, shape index: {}]
  %s2 = inlined_call_operand.vmem [shape: f32[16,1], index: 2, kind: input, shape index: {}]
  %s3 = inlined_call_operand.vmem [shape: bf16[16,384], index: 3, kind: output, shape index: {}]
  %s4 = sld [smem:[#allocation0]]
  $region22: #{net1_activate_forward.3} parent=0
    _
  %s6 = ssub.s32 1, %s4
  %s7 = scalar_select 0, %s6, %s4
  // Predicated region
  $region2: #{net1_activate_forward.3} parent=0 // pred_check
    _
  $region3: #{net1_activate_forward.3} parent=0 // pred_check_branch
    %9 = sbr.rel (0) target = $region5
  $region4: #{net1_activate_forward.3} parent=0 // pred_region
    _
  $region5: #{net1_activate_forward.3} parent=0 // pred_fallthru
    _
  // Predicated region
  $region6: #{net1_activate_forward.3} parent=0 // pred_check
    _
  $region7: #{net1_activate_forward.3} parent=0 // pred_check_branch
    %11 = sbr.rel (0) target = $region9
  $region8: #{net1_activate_forward.3} parent=0 // pred_region
    _
  $region9: #{net1_activate_forward.3} parent=0 // pred_fallthru
    _
  // Predicated region
  $region10: #{net1_activate_forward.3} parent=0 // pred_check
    _
  $region11: #{net1_activate_forward.3} parent=0 // pred_check_branch
    %13 = sbr.rel (0) target = $region13
  $region12: #{net1_activate_forward.3} parent=0 // pred_region
    _
  $region13: #{net1_activate_forward.3} parent=0 // pred_fallthru
    _
  %v15 = vld [vmem:[%s1] sm:$0xf]
  %v16 = vld [vmem:[%s1 + $0x4] sm:$0xf]
  %v17 = vld [vmem:[%s2] sm:$0xff]
  %v18 = vld [vmem:[%s2 + $0x8] sm:$0xff]
  %v19 = vld [vmem:[%s0] sm:$0xff]
  %v20 = vld [vmem:[%s0 + $0x8] sm:$0xf]
  %v21 = vld [vmem:[%s0 + $0xc] sm:$0xff]
  %v22 = vld [vmem:[%s0 + $0x14] sm:$0xf]
  %24 = vset.pattern.permute.xlu0 0
  %25 = vperm.xlu0 %24, %v17
  %v26 = vpop.permute.xlu0 %25
  %29 = vset.pattern.permute.xlu0 0
  %30 = vperm.xlu0 %29, %v18
  %v31 = vpop.permute.xlu0 %30
  %v35 = vunpack.c.l.b16 %v15
  %v36 = vunpack.c.l.b16 %v16
  %v37 = vpack.c.b16 %v36, %v35
  %v42 = vunpack.c.l.b16 %v19
  %v43 = vunpack.c.h.b16 %v19
  %v44 = vunpack.c.l.b16 %v20
  %v45 = vunpack.c.l.b16 %v21
  %v46 = vunpack.c.h.b16 %v21
  %v47 = vunpack.c.l.b16 %v22
  %v48 = vpack.c.b16 %v45, %v42
  %v49 = vpack.c.b16 %v46, %v43
  %v50 = vpack.c.b16 %v47, %v44
  %vm54 = vcmask 130048
  %v56 = vsel %vm54, %v37, 0
  %58 = vmatpush.bf16.msra.mxu0 0
  %59 = vmatpush.bf16.msra.mxu0 0
  %60 = vmatpush.bf16.msra.mxu0 0
  %61 = vmatpush.bf16.msra.mxu0 0
  %62 = vmatpush.bf16.msra.mxu0 0
  %63 = vmatpush.bf16.msra.mxu0 0
  %64 = vmatpush.bf16.msra.mxu0 0
  %65 = vmatpush.bf16.msra.mxu0 %v48
  %66 = vmatmul.bf16.gmra.mxu0 %v56
  %v67 = vpop.f32.mrf.mxu0
  %v68 = vadd.f32 %v26, %v67
  %v69 = vpop.f32.mrf.mxu0
  %v70 = vadd.f32 %v31, %v69
  %71 = vdwg.mxu0
  %72 = vmatpush.bf16.msra.mxu0 0
  %73 = vmatpush.bf16.msra.mxu0 0
  %74 = vmatpush.bf16.msra.mxu0 0
  %75 = vmatpush.bf16.msra.mxu0 0
  %76 = vmatpush.bf16.msra.mxu0 0
  %77 = vmatpush.bf16.msra.mxu0 0
  %78 = vmatpush.bf16.msra.mxu0 0
  %79 = vmatpush.bf16.msra.mxu0 %v49
  %80 = vmatmul.bf16.gmra.mxu0 %v56
  %v81 = vpop.f32.mrf.mxu0
  %v82 = vadd.f32 %v26, %v81
  %v83 = vpop.f32.mrf.mxu0
  %v84 = vadd.f32 %v31, %v83
  %85 = vdwg.mxu0
  %86 = vmatpush.bf16.msra.mxu0 0
  %87 = vmatpush.bf16.msra.mxu0 0
  %88 = vmatpush.bf16.msra.mxu0 0
  %89 = vmatpush.bf16.msra.mxu0 0
  %90 = vmatpush.bf16.msra.mxu0 0
  %91 = vmatpush.bf16.msra.mxu0 0
  %92 = vmatpush.bf16.msra.mxu0 0
  %93 = vmatpush.bf16.msra.mxu0 %v50
  %94 = vmatmul.bf16.gmra.mxu0 %v56
  %v95 = vpop.f32.mrf.mxu0
  %v96 = vadd.f32 %v26, %v95
  %v97 = vpop.f32.mrf.mxu0
  %v98 = vadd.f32 %v31, %v97
  %99 = vdwg.mxu0
  %v100 = vand.u32 2147483647, %v68
  %v101 = vand.u32 2147483647, %v82
  %v102 = vand.u32 2147483647, %v96
  %v103 = vand.u32 2147483647, %v70
  %v104 = vand.u32 2147483647, %v84
  %v105 = vand.u32 2147483647, %v98
  %s106 = scalar_lea.vmem %s0, 24
  %v107 = vld [vmem:[%s106] sm:$0xff]
  %v108 = vld [vmem:[%s106 + $0x8] sm:$0xf]
  %v109 = vld [vmem:[%s106 + $0xc] sm:$0xff]
  %v110 = vld [vmem:[%s106 + $0x14] sm:$0xf]
  %v115 = vunpack.c.l.b16 %v107
  %v116 = vunpack.c.h.b16 %v107
  %v117 = vunpack.c.l.b16 %v108
  %v118 = vunpack.c.l.b16 %v109
  %v119 = vunpack.c.h.b16 %v109
  %v120 = vunpack.c.l.b16 %v110
  %v121 = vpack.c.b16 %v118, %v115
  %v122 = vpack.c.b16 %v119, %v116
  %v123 = vpack.c.b16 %v120, %v117
  %127 = vmatpush.bf16.msra.mxu0 0
  %128 = vmatpush.bf16.msra.mxu0 0
  %129 = vmatpush.bf16.msra.mxu0 0
  %130 = vmatpush.bf16.msra.mxu0 0
  %131 = vmatpush.bf16.msra.mxu0 0
  %132 = vmatpush.bf16.msra.mxu0 0
  %133 = vmatpush.bf16.msra.mxu0 0
  %134 = vmatpush.bf16.msra.mxu0 %v121
  %135 = vmatmul.bf16.gmra.mxu0 %v56
  %v136 = vpop.f32.mrf.mxu0
  %v137 = vadd.f32 %v26, %v136
  %v138 = vpop.f32.mrf.mxu0
  %v139 = vadd.f32 %v31, %v138
  %140 = vdwg.mxu0
  %141 = vmatpush.bf16.msra.mxu0 0
  %142 = vmatpush.bf16.msra.mxu0 0
  %143 = vmatpush.bf16.msra.mxu0 0
  %144 = vmatpush.bf16.msra.mxu0 0
  %145 = vmatpush.bf16.msra.mxu0 0
  %146 = vmatpush.bf16.msra.mxu0 0
  %147 = vmatpush.bf16.msra.mxu0 0
  %148 = vmatpush.bf16.msra.mxu0 %v122
  %149 = vmatmul.bf16.gmra.mxu0 %v56
  %v150 = vpop.f32.mrf.mxu0
  %v151 = vadd.f32 %v26, %v150
  %v152 = vpop.f32.mrf.mxu0
  %v153 = vadd.f32 %v31, %v152
  %154 = vdwg.mxu0
  %155 = vmatpush.bf16.msra.mxu0 0
  %156 = vmatpush.bf16.msra.mxu0 0
  %157 = vmatpush.bf16.msra.mxu0 0
  %158 = vmatpush.bf16.msra.mxu0 0
  %159 = vmatpush.bf16.msra.mxu0 0
  %160 = vmatpush.bf16.msra.mxu0 0
  %161 = vmatpush.bf16.msra.mxu0 0
  %162 = vmatpush.bf16.msra.mxu0 %v123
  %163 = vmatmul.bf16.gmra.mxu0 %v56
  %v164 = vpop.f32.mrf.mxu0
  %v165 = vadd.f32 %v26, %v164
  %v166 = vpop.f32.mrf.mxu0
  %v167 = vadd.f32 %v31, %v166
  %168 = vdwg.mxu0
  %v169 = vand.u32 2147483647, %v137
  %v170 = vand.u32 2147483647, %v151
  %v171 = vand.u32 2147483647, %v165
  %v172 = vand.u32 2147483647, %v139
  %v173 = vand.u32 2147483647, %v153
  %v174 = vand.u32 2147483647, %v167
  %v175 = vmax.f32 %v100, %v169
  %v176 = vmax.f32 %v101, %v170
  %v177 = vmax.f32 %v102, %v171
  %v178 = vmax.f32 %v103, %v172
  %v179 = vmax.f32 %v104, %v173
  %v180 = vmax.f32 %v105, %v174
  %s181 = scalar_lea.vmem %s0, 48
  %v182 = vld [vmem:[%s181] sm:$0xff]
  %v183 = vld [vmem:[%s181 + $0x8] sm:$0xf]
  %v184 = vld [vmem:[%s181 + $0xc] sm:$0xff]
  %v185 = vld [vmem:[%s181 + $0x14] sm:$0xf]
  %v190 = vunpack.c.l.b16 %v182
  %v191 = vunpack.c.h.b16 %v182
  %v192 = vunpack.c.l.b16 %v183
  %v193 = vunpack.c.l.b16 %v184
  %v194 = vunpack.c.h.b16 %v184
  %v195 = vunpack.c.l.b16 %v185
  %v196 = vpack.c.b16 %v193, %v190
  %v197 = vpack.c.b16 %v194, %v191
  %v198 = vpack.c.b16 %v195, %v192
  %202 = vmatpush.bf16.msra.mxu0 0
  %203 = vmatpush.bf16.msra.mxu0 0
  %204 = vmatpush.bf16.msra.mxu0 0
  %205 = vmatpush.bf16.msra.mxu0 0
  %206 = vmatpush.bf16.msra.mxu0 0
  %207 = vmatpush.bf16.msra.mxu0 0
  %208 = vmatpush.bf16.msra.mxu0 0
  %209 = vmatpush.bf16.msra.mxu0 %v196
  %210 = vmatmul.bf16.gmra.mxu0 %v56
  %v211 = vpop.f32.mrf.mxu0
  %v212 = vadd.f32 %v26, %v211
  %v213 = vpop.f32.mrf.mxu0
  %v214 = vadd.f32 %v31, %v213
  %215 = vdwg.mxu0
  %216 = vmatpush.bf16.msra.mxu0 0
  %217 = vmatpush.bf16.msra.mxu0 0
  %218 = vmatpush.bf16.msra.mxu0 0
  %219 = vmatpush.bf16.msra.mxu0 0
  %220 = vmatpush.bf16.msra.mxu0 0
  %221 = vmatpush.bf16.msra.mxu0 0
  %222 = vmatpush.bf16.msra.mxu0 0
  %223 = vmatpush.bf16.msra.mxu0 %v197
  %224 = vmatmul.bf16.gmra.mxu0 %v56
  %v225 = vpop.f32.mrf.mxu0
  %v226 = vadd.f32 %v26, %v225
  %v227 = vpop.f32.mrf.mxu0
  %v228 = vadd.f32 %v31, %v227
  %229 = vdwg.mxu0
  %230 = vmatpush.bf16.msra.mxu0 0
  %231 = vmatpush.bf16.msra.mxu0 0
  %232 = vmatpush.bf16.msra.mxu0 0
  %233 = vmatpush.bf16.msra.mxu0 0
  %234 = vmatpush.bf16.msra.mxu0 0
  %235 = vmatpush.bf16.msra.mxu0 0
  %236 = vmatpush.bf16.msra.mxu0 0
  %237 = vmatpush.bf16.msra.mxu0 %v198
  %238 = vmatmul.bf16.gmra.mxu0 %v56
  %v239 = vpop.f32.mrf.mxu0
  %v240 = vadd.f32 %v26, %v239
  %v241 = vpop.f32.mrf.mxu0
  %v242 = vadd.f32 %v31, %v241
  %243 = vdwg.mxu0
  %v244 = vand.u32 2147483647, %v212
  %v245 = vand.u32 2147483647, %v226
  %v246 = vand.u32 2147483647, %v240
  %v247 = vand.u32 2147483647, %v214
  %v248 = vand.u32 2147483647, %v228
  %v249 = vand.u32 2147483647, %v242
  %s250 = scalar_lea.vmem %s0, 72
  %v251 = vld [vmem:[%s250] sm:$0xff]
  %v252 = vld [vmem:[%s250 + $0x8] sm:$0xf]
  %v253 = vld [vmem:[%s250 + $0xc] sm:$0xff]
  %v254 = vld [vmem:[%s250 + $0x14] sm:$0xf]
  %v259 = vunpack.c.l.b16 %v251
  %v260 = vunpack.c.h.b16 %v251
  %v261 = vunpack.c.l.b16 %v252
  %v262 = vunpack.c.l.b16 %v253
  %v263 = vunpack.c.h.b16 %v253
  %v264 = vunpack.c.l.b16 %v254
  %v265 = vpack.c.b16 %v262, %v259
  %v266 = vpack.c.b16 %v263, %v260
  %v267 = vpack.c.b16 %v264, %v261
  %271 = vmatpush.bf16.msra.mxu0 0
  %272 = vmatpush.bf16.msra.mxu0 0
  %273 = vmatpush.bf16.msra.mxu0 0
  %274 = vmatpush.bf16.msra.mxu0 0
  %275 = vmatpush.bf16.msra.mxu0 0
  %276 = vmatpush.bf16.msra.mxu0 0
  %277 = vmatpush.bf16.msra.mxu0 0
  %278 = vmatpush.bf16.msra.mxu0 %v265
  %279 = vmatmul.bf16.gmra.mxu0 %v56
  %v280 = vpop.f32.mrf.mxu0
  %v281 = vadd.f32 %v26, %v280
  %v282 = vpop.f32.mrf.mxu0
  %v283 = vadd.f32 %v31, %v282
  %284 = vdwg.mxu0
  %285 = vmatpush.bf16.msra.mxu0 0
  %286 = vmatpush.bf16.msra.mxu0 0
  %287 = vmatpush.bf16.msra.mxu0 0
  %288 = vmatpush.bf16.msra.mxu0 0
  %289 = vmatpush.bf16.msra.mxu0 0
  %290 = vmatpush.bf16.msra.mxu0 0
  %291 = vmatpush.bf16.msra.mxu0 0
  %292 = vmatpush.bf16.msra.mxu0 %v266
  %293 = vmatmul.bf16.gmra.mxu0 %v56
  %v294 = vpop.f32.mrf.mxu0
  %v295 = vadd.f32 %v26, %v294
  %v296 = vpop.f32.mrf.mxu0
  %v297 = vadd.f32 %v31, %v296
  %298 = vdwg.mxu0
  %299 = vmatpush.bf16.msra.mxu0 0
  %300 = vmatpush.bf16.msra.mxu0 0
  %301 = vmatpush.bf16.msra.mxu0 0
  %302 = vmatpush.bf16.msra.mxu0 0
  %303 = vmatpush.bf16.msra.mxu0 0
  %304 = vmatpush.bf16.msra.mxu0 0
  %305 = vmatpush.bf16.msra.mxu0 0
  %306 = vmatpush.bf16.msra.mxu0 %v267
  %307 = vmatmul.bf16.gmra.mxu0 %v56
  %v308 = vpop.f32.mrf.mxu0
  %v309 = vadd.f32 %v26, %v308
  %v310 = vpop.f32.mrf.mxu0
  %v311 = vadd.f32 %v31, %v310
  %312 = vdwg.mxu0
  %v313 = vand.u32 2147483647, %v281
  %v314 = vand.u32 2147483647, %v295
  %v315 = vand.u32 2147483647, %v309
  %v316 = vand.u32 2147483647, %v283
  %v317 = vand.u32 2147483647, %v297
  %v318 = vand.u32 2147483647, %v311
  %v319 = vmax.f32 %v244, %v313
  %v320 = vmax.f32 %v245, %v314
  %v321 = vmax.f32 %v246, %v315
  %v322 = vmax.f32 %v247, %v316
  %v323 = vmax.f32 %v248, %v317
  %v324 = vmax.f32 %v249, %v318
  %v325 = vmax.f32 %v175, %v319
  %v326 = vmax.f32 %v176, %v320
  %v327 = vmax.f32 %v177, %v321
  %v328 = vmax.f32 %v178, %v322
  %v329 = vmax.f32 %v179, %v323
  %v330 = vmax.f32 %v180, %v324
  %v331 = vpack.c.bf16 %v326, %v325
  %v332 = vpack.c.bf16 %v327, %v327
  %v333 = vpack.c.bf16 %v329, %v328
  %v334 = vpack.c.bf16 %v330, %v330
  %335 = vst [vmem:[%s3] sm:$0xff] %v331
  %336 = vst [vmem:[%s3 + $0x8] sm:$0xf] %v332
  %337 = vst [vmem:[%s3 + $0xc] sm:$0xff] %v333
  %338 = vst [vmem:[%s3 + $0x14] sm:$0xf] %v334
  // Predicated region
  $region14: #{net1_activate_forward.3} parent=0 // pred_check
    _
  $region15: #{net1_activate_forward.3} parent=0 // pred_check_branch
    %340 = sbr.rel (0) target = $region17
  $region16: #{net1_activate_forward.3} parent=0 // pred_region
    _
  $region17: #{net1_activate_forward.3} parent=0 // pred_fallthru
    _
  // Predicated region
  $region18: #{net1_activate_forward.3} parent=0 // pred_check
    _
  $region19: #{net1_activate_forward.3} parent=0 // pred_check_branch
    %342 = sbr.rel (0) target = $region21
  $region20: #{net1_activate_forward.3} parent=0 // pred_region
    _
  $region21: #{net1_activate_forward.3} parent=0 // pred_fallthru
    _

// kernel: net1_activate_forward.4
$region0: #{net1_activate_forward.4}
  #allocation0 [shape = 'u32[]', space=smem, size = 0x4, offset = 0x4, fixed_abs, tag = 'smem constant byte address 0x4 - core index']
  #allocation1 [shape = 'u32[72,128]{1,0:T(1,128)}', space=vmem, size = 0x9000, scoped, tag = 'internal scratch']
  %s0 = inlined_call_operand.vmem [shape: bf16[4,144,128], index: 0, kind: input, shape index: {}]
  %s1 = inlined_call_operand.vmem [shape: bf16[24,144], index: 1, kind: input, shape index: {}]
  %s2 = inlined_call_operand.vmem [shape: f32[24,1], index: 2, kind: input, shape index: {}]
  %s3 = inlined_call_operand.vmem [shape: bf16[24,128], index: 3, kind: output, shape index: {}]
  %s4 = sld [smem:[#allocation0]]
  $region22: #{net1_activate_forward.4} parent=0
    _
  %s6 = ssub.s32 1, %s4
  %s7 = scalar_select 0, %s6, %s4
  // Predicated region
  $region2: #{net1_activate_forward.4} parent=0 // pred_check
    _
  $region3: #{net1_activate_forward.4} parent=0 // pred_check_branch
    %9 = sbr.rel (0) target = $region5
  $region4: #{net1_activate_forward.4} parent=0 // pred_region
    _
  $region5: #{net1_activate_forward.4} parent=0 // pred_fallthru
    _
  // Predicated region
  $region6: #{net1_activate_forward.4} parent=0 // pred_check
    _
  $region7: #{net1_activate_forward.4} parent=0 // pred_check_branch
    %11 = sbr.rel (0) target = $region9
  $region8: #{net1_activate_forward.4} parent=0 // pred_region
    _
  $region9: #{net1_activate_forward.4} parent=0 // pred_fallthru
    _
  // Predicated region
  $region10: #{net1_activate_forward.4} parent=0 // pred_check
    _
  $region11: #{net1_activate_forward.4} parent=0 // pred_check_branch
    %13 = sbr.rel (0) target = $region13
  $region12: #{net1_activate_forward.4} parent=0 // pred_region
    _
  $region13: #{net1_activate_forward.4} parent=0 // pred_fallthru
    _
  %v15 = vld [vmem:[%s1] sm:$0xff]
  %v16 = vld [vmem:[%s1 + $0x8] sm:$0xff]
  %v17 = vld [vmem:[%s1 + $0x10] sm:$0xff]
  %v18 = vld [vmem:[%s2] sm:$0xff]
  %v19 = vld [vmem:[%s2 + $0x8] sm:$0xff]
  %v20 = vld [vmem:[%s2 + $0x10] sm:$0xff]
  %v21 = vld [vmem:[%s0] sm:$0xf]
  %v22 = vld [vmem:[%s0 + $0x4] sm:$0xf]
  %v23 = vld [vmem:[%s0 + $0x8] sm:$0xf]
  %v24 = vld [vmem:[%s0 + $0xc] sm:$0xf]
  %v25 = vld [vmem:[%s0 + $0x10] sm:$0xf]
  %v26 = vld [vmem:[%s0 + $0x14] sm:$0xf]
  %v27 = vld [vmem:[%s0 + $0x18] sm:$0xf]
  %v28 = vld [vmem:[%s0 + $0x1c] sm:$0xf]
  %v29 = vld [vmem:[%s0 + $0x20] sm:$0xf]
  %v30 = vld [vmem:[%s0 + $0x24] sm:$0xf]
  %v31 = vld [vmem:[%s0 + $0x28] sm:$0xf]
  %v32 = vld [vmem:[%s0 + $0x2c] sm:$0xf]
  %v33 = vld [vmem:[%s0 + $0x30] sm:$0xf]
  %v34 = vld [vmem:[%s0 + $0x34] sm:$0xf]
  %v35 = vld [vmem:[%s0 + $0x38] sm:$0xf]
  %v36 = vld [vmem:[%s0 + $0x3c] sm:$0xf]
  %v37 = vld [vmem:[%s0 + $0x40] sm:$0xf]
  %v38 = vld [vmem:[%s0 + $0x44] sm:$0xf]
  %40 = vset.pattern.permute.xlu0 0
  %41 = vperm.xlu0 %40, %v18
  %v42 = vpop.permute.xlu0 %41
  %45 = vset.pattern.permute.xlu0 0
  %46 = vperm.xlu0 %45, %v19
  %v47 = vpop.permute.xlu0 %46
  %50 = vset.pattern.permute.xlu0 0
  %51 = vperm.xlu0 %50, %v20
  %v52 = vpop.permute.xlu0 %51
  %v57 = vunpack.c.l.b16 %v15
  %v58 = vunpack.c.h.b16 %v15
  %v59 = vunpack.c.l.b16 %v16
  %v60 = vunpack.c.h.b16 %v16
  %v61 = vunpack.c.l.b16 %v17
  %v62 = vunpack.c.h.b16 %v17
  %v63 = vpack.c.b16 %v59, %v57
  %v64 = vpack.c.b16 %v60, %v58
  %v65 = vpack.c.b16 %v61, %v61
  %v66 = vpack.c.b16 %v62, %v62
  %v87 = vunpack.c.l.b16 %v21
  %v88 = vunpack.c.l.b16 %v22
  %v89 = vunpack.c.l.b16 %v23
  %v90 = vunpack.c.l.b16 %v24
  %v91 = vunpack.c.l.b16 %v25
  %v92 = vunpack.c.l.b16 %v26
  %v93 = vunpack.c.l.b16 %v27
  %v94 = vunpack.c.l.b16 %v28
  %v95 = vunpack.c.l.b16 %v29
  %v96 = vunpack.c.l.b16 %v30
  %v97 = vunpack.c.l.b16 %v31
  %v98 = vunpack.c.l.b16 %v32
  %v99 = vunpack.c.l.b16 %v33
  %v100 = vunpack.c.l.b16 %v34
  %v101 = vunpack.c.l.b16 %v35
  %v102 = vunpack.c.l.b16 %v36
  %v103 = vunpack.c.l.b16 %v37
  %v104 = vunpack.c.l.b16 %v38
  %v105 = vpack.c.b16 %v88, %v87
  %v106 = vpack.c.b16 %v90, %v89
  %v107 = vpack.c.b16 %v92, %v91
  %v108 = vpack.c.b16 %v94, %v93
  %v109 = vpack.c.b16 %v96, %v95
  %v110 = vpack.c.b16 %v98, %v97
  %v111 = vpack.c.b16 %v100, %v99
  %v112 = vpack.c.b16 %v102, %v101
  %v113 = vpack.c.b16 %v104, %v103
  %vm123 = vcmask 130048
  %v125 = vsel %vm123, %v64, 0
  %v128 = vsel %vm123, %v66, 0
  %130 = vmatpush.bf16.msra.mxu0 %v112
  %131 = vmatpush.bf16.msra.mxu0 %v111
  %132 = vmatpush.bf16.msra.mxu0 %v110
  %133 = vmatpush.bf16.msra.mxu0 %v109
  %134 = vmatpush.bf16.msra.mxu0 %v108
  %135 = vmatpush.bf16.msra.mxu0 %v107
  %136 = vmatpush.bf16.msra.mxu0 %v106
  %137 = vmatpush.bf16.msra.mxu0 %v105
  %138 = vmatmul.bf16.gmra.mxu0 %v63
  %v139 = vpop.f32.mrf.mxu0
  %v140 = vadd.f32 %v42, %v139
  %v141 = vpop.f32.mrf.mxu0
  %v142 = vadd.f32 %v47, %v141
  %143 = vmatmul.bf16.gmra.mxu0 %v65
  %v144 = vpop.f32.mrf.mxu0
  %v145 = vadd.f32 %v52, %v144
  %v146 = vpop.f32.mrf.mxu0
  %147 = vdwg.mxu0
  %148 = vmatpush.bf16.msra.mxu0 0
  %149 = vmatpush.bf16.msra.mxu0 0
  %150 = vmatpush.bf16.msra.mxu0 0
  %151 = vmatpush.bf16.msra.mxu0 0
  %152 = vmatpush.bf16.msra.mxu0 0
  %153 = vmatpush.bf16.msra.mxu0 0
  %154 = vmatpush.bf16.msra.mxu0 0
  %155 = vmatpush.bf16.msra.mxu0 %v113
  %156 = vmatmul.bf16.gmra.mxu0 %v125
  %v157 = vpop.f32.mrf.mxu0
  %v158 = vadd.f32 %v140, %v157
  %v159 = vpop.f32.mrf.mxu0
  %v160 = vadd.f32 %v142, %v159
  %161 = vmatmul.bf16.gmra.mxu0 %v128
  %v162 = vpop.f32.mrf.mxu0
  %v163 = vadd.f32 %v145, %v162
  %v164 = vpop.f32.mrf.mxu0
  %165 = vdwg.mxu0
  %v166 = vand.u32 2147483647, %v158
  %v167 = vand.u32 2147483647, %v160
  %v168 = vand.u32 2147483647, %v163
  %s169 = scalar_lea.vmem %s0, 72
  %v170 = vld [vmem:[%s169] sm:$0xf]
  %v171 = vld [vmem:[%s169 + $0x4] sm:$0xf]
  %v172 = vld [vmem:[%s169 + $0x8] sm:$0xf]
  %v173 = vld [vmem:[%s169 + $0xc] sm:$0xf]
  %v174 = vld [vmem:[%s169 + $0x10] sm:$0xf]
  %v175 = vld [vmem:[%s169 + $0x14] sm:$0xf]
  %v176 = vld [vmem:[%s169 + $0x18] sm:$0xf]
  %v177 = vld [vmem:[%s169 + $0x1c] sm:$0xf]
  %v178 = vld [vmem:[%s169 + $0x20] sm:$0xf]
  %v179 = vld [vmem:[%s169 + $0x24] sm:$0xf]
  %v180 = vld [vmem:[%s169 + $0x28] sm:$0xf]
  %v181 = vld [vmem:[%s169 + $0x2c] sm:$0xf]
  %v182 = vld [vmem:[%s169 + $0x30] sm:$0xf]
  %v183 = vld [vmem:[%s169 + $0x34] sm:$0xf]
  %v184 = vld [vmem:[%s169 + $0x38] sm:$0xf]
  %v185 = vld [vmem:[%s169 + $0x3c] sm:$0xf]
  %v186 = vld [vmem:[%s169 + $0x40] sm:$0xf]
  %v187 = vld [vmem:[%s169 + $0x44] sm:$0xf]
  %v206 = vunpack.c.l.b16 %v170
  %v207 = vunpack.c.l.b16 %v171
  %v208 = vunpack.c.l.b16 %v172
  %v209 = vunpack.c.l.b16 %v173
  %v210 = vunpack.c.l.b16 %v174
  %v211 = vunpack.c.l.b16 %v175
  %v212 = vunpack.c.l.b16 %v176
  %v213 = vunpack.c.l.b16 %v177
  %v214 = vunpack.c.l.b16 %v178
  %v215 = vunpack.c.l.b16 %v179
  %v216 = vunpack.c.l.b16 %v180
  %v217 = vunpack.c.l.b16 %v181
  %v218 = vunpack.c.l.b16 %v182
  %v219 = vunpack.c.l.b16 %v183
  %v220 = vunpack.c.l.b16 %v184
  %v221 = vunpack.c.l.b16 %v185
  %v222 = vunpack.c.l.b16 %v186
  %v223 = vunpack.c.l.b16 %v187
  %v224 = vpack.c.b16 %v207, %v206
  %v225 = vpack.c.b16 %v209, %v208
  %v226 = vpack.c.b16 %v211, %v210
  %v227 = vpack.c.b16 %v213, %v212
  %v228 = vpack.c.b16 %v215, %v214
  %v229 = vpack.c.b16 %v217, %v216
  %v230 = vpack.c.b16 %v219, %v218
  %v231 = vpack.c.b16 %v221, %v220
  %v232 = vpack.c.b16 %v223, %v222
  %242 = vmatpush.bf16.msra.mxu0 %v231
  %243 = vmatpush.bf16.msra.mxu0 %v230
  %244 = vmatpush.bf16.msra.mxu0 %v229
  %245 = vmatpush.bf16.msra.mxu0 %v228
  %246 = vmatpush.bf16.msra.mxu0 %v227
  %247 = vmatpush.bf16.msra.mxu0 %v226
  %248 = vmatpush.bf16.msra.mxu0 %v225
  %249 = vmatpush.bf16.msra.mxu0 %v224
  %250 = vmatmul.bf16.gmra.mxu0 %v63
  %v251 = vpop.f32.mrf.mxu0
  %v252 = vadd.f32 %v42, %v251
  %v253 = vpop.f32.mrf.mxu0
  %v254 = vadd.f32 %v47, %v253
  %255 = vmatmul.bf16.gmra.mxu0 %v65
  %v256 = vpop.f32.mrf.mxu0
  %v257 = vadd.f32 %v52, %v256
  %v258 = vpop.f32.mrf.mxu0
  %259 = vdwg.mxu0
  %260 = vmatpush.bf16.msra.mxu0 0
  %261 = vmatpush.bf16.msra.mxu0 0
  %262 = vmatpush.bf16.msra.mxu0 0
  %263 = vmatpush.bf16.msra.mxu0 0
  %264 = vmatpush.bf16.msra.mxu0 0
  %265 = vmatpush.bf16.msra.mxu0 0
  %266 = vmatpush.bf16.msra.mxu0 0
  %267 = vmatpush.bf16.msra.mxu0 %v232
  %268 = vmatmul.bf16.gmra.mxu0 %v125
  %v269 = vpop.f32.mrf.mxu0
  %v270 = vadd.f32 %v252, %v269
  %v271 = vpop.f32.mrf.mxu0
  %v272 = vadd.f32 %v254, %v271
  %273 = vmatmul.bf16.gmra.mxu0 %v128
  %v274 = vpop.f32.mrf.mxu0
  %v275 = vadd.f32 %v257, %v274
  %v276 = vpop.f32.mrf.mxu0
  %277 = vdwg.mxu0
  %v278 = vand.u32 2147483647, %v270
  %v279 = vand.u32 2147483647, %v272
  %v280 = vand.u32 2147483647, %v275
  %v281 = vmax.f32 %v166, %v278
  %v282 = vmax.f32 %v167, %v279
  %v283 = vmax.f32 %v168, %v280
  %s284 = scalar_lea.vmem %s0, 144
  %v285 = vld [vmem:[%s284] sm:$0xf]
  %v286 = vld [vmem:[%s284 + $0x4] sm:$0xf]
  %v287 = vld [vmem:[%s284 + $0x8] sm:$0xf]
  %v288 = vld [vmem:[%s284 + $0xc] sm:$0xf]
  %v289 = vld [vmem:[%s284 + $0x10] sm:$0xf]
  %v290 = vld [vmem:[%s284 + $0x14] sm:$0xf]
  %v291 = vld [vmem:[%s284 + $0x18] sm:$0xf]
  %v292 = vld [vmem:[%s284 + $0x1c] sm:$0xf]
  %v293 = vld [vmem:[%s284 + $0x20] sm:$0xf]
  %v294 = vld [vmem:[%s284 + $0x24] sm:$0xf]
  %v295 = vld [vmem:[%s284 + $0x28] sm:$0xf]
  %v296 = vld [vmem:[%s284 + $0x2c] sm:$0xf]
  %v297 = vld [vmem:[%s284 + $0x30] sm:$0xf]
  %v298 = vld [vmem:[%s284 + $0x34] sm:$0xf]
  %v299 = vld [vmem:[%s284 + $0x38] sm:$0xf]
  %v300 = vld [vmem:[%s284 + $0x3c] sm:$0xf]
  %v301 = vld [vmem:[%s284 + $0x40] sm:$0xf]
  %v302 = vld [vmem:[%s284 + $0x44] sm:$0xf]
  %v321 = vunpack.c.l.b16 %v285
  %v322 = vunpack.c.l.b16 %v286
  %v323 = vunpack.c.l.b16 %v287
  %v324 = vunpack.c.l.b16 %v288
  %v325 = vunpack.c.l.b16 %v289
  %v326 = vunpack.c.l.b16 %v290
  %v327 = vunpack.c.l.b16 %v291
  %v328 = vunpack.c.l.b16 %v292
  %v329 = vunpack.c.l.b16 %v293
  %v330 = vunpack.c.l.b16 %v294
  %v331 = vunpack.c.l.b16 %v295
  %v332 = vunpack.c.l.b16 %v296
  %v333 = vunpack.c.l.b16 %v297
  %v334 = vunpack.c.l.b16 %v298
  %v335 = vunpack.c.l.b16 %v299
  %v336 = vunpack.c.l.b16 %v300
  %v337 = vunpack.c.l.b16 %v301
  %v338 = vunpack.c.l.b16 %v302
  %v339 = vpack.c.b16 %v322, %v321
  %v340 = vpack.c.b16 %v324, %v323
  %v341 = vpack.c.b16 %v326, %v325
  %v342 = vpack.c.b16 %v328, %v327
  %v343 = vpack.c.b16 %v330, %v329
  %v344 = vpack.c.b16 %v332, %v331
  %v345 = vpack.c.b16 %v334, %v333
  %v346 = vpack.c.b16 %v336, %v335
  %v347 = vpack.c.b16 %v338, %v337
  %357 = vmatpush.bf16.msra.mxu0 %v346
  %358 = vmatpush.bf16.msra.mxu0 %v345
  %359 = vmatpush.bf16.msra.mxu0 %v344
  %360 = vmatpush.bf16.msra.mxu0 %v343
  %361 = vmatpush.bf16.msra.mxu0 %v342
  %362 = vmatpush.bf16.msra.mxu0 %v341
  %363 = vmatpush.bf16.msra.mxu0 %v340
  %364 = vmatpush.bf16.msra.mxu0 %v339
  %365 = vmatmul.bf16.gmra.mxu0 %v63
  %v366 = vpop.f32.mrf.mxu0
  %v367 = vadd.f32 %v42, %v366
  %v368 = vpop.f32.mrf.mxu0
  %v369 = vadd.f32 %v47, %v368
  %370 = vmatmul.bf16.gmra.mxu0 %v65
  %v371 = vpop.f32.mrf.mxu0
  %v372 = vadd.f32 %v52, %v371
  %v373 = vpop.f32.mrf.mxu0
  %374 = vdwg.mxu0
  %375 = vmatpush.bf16.msra.mxu0 0
  %376 = vmatpush.bf16.msra.mxu0 0
  %377 = vmatpush.bf16.msra.mxu0 0
  %378 = vmatpush.bf16.msra.mxu0 0
  %379 = vmatpush.bf16.msra.mxu0 0
  %380 = vmatpush.bf16.msra.mxu0 0
  %381 = vmatpush.bf16.msra.mxu0 0
  %382 = vmatpush.bf16.msra.mxu0 %v347
  %383 = vmatmul.bf16.gmra.mxu0 %v125
  %v384 = vpop.f32.mrf.mxu0
  %v385 = vadd.f32 %v367, %v384
  %v386 = vpop.f32.mrf.mxu0
  %v387 = vadd.f32 %v369, %v386
  %388 = vmatmul.bf16.gmra.mxu0 %v128
  %v389 = vpop.f32.mrf.mxu0
  %v390 = vadd.f32 %v372, %v389
  %v391 = vpop.f32.mrf.mxu0
  %392 = vdwg.mxu0
  %v393 = vand.u32 2147483647, %v385
  %v394 = vand.u32 2147483647, %v387
  %v395 = vand.u32 2147483647, %v390
  %s396 = scalar_lea.vmem %s0, 216
  %v397 = vld [vmem:[%s396] sm:$0xf]
  %v398 = vld [vmem:[%s396 + $0x4] sm:$0xf]
  %v399 = vld [vmem:[%s396 + $0x8] sm:$0xf]
  %v400 = vld [vmem:[%s396 + $0xc] sm:$0xf]
  %v401 = vld [vmem:[%s396 + $0x10] sm:$0xf]
  %v402 = vld [vmem:[%s396 + $0x14] sm:$0xf]
  %v403 = vld [vmem:[%s396 + $0x18] sm:$0xf]
  %v404 = vld [vmem:[%s396 + $0x1c] sm:$0xf]
  %v405 = vld [vmem:[%s396 + $0x20] sm:$0xf]
  %v406 = vld [vmem:[%s396 + $0x24] sm:$0xf]
  %v407 = vld [vmem:[%s396 + $0x28] sm:$0xf]
  %v408 = vld [vmem:[%s396 + $0x2c] sm:$0xf]
  %v409 = vld [vmem:[%s396 + $0x30] sm:$0xf]
  %v410 = vld [vmem:[%s396 + $0x34] sm:$0xf]
  %v411 = vld [vmem:[%s396 + $0x38] sm:$0xf]
  %v412 = vld [vmem:[%s396 + $0x3c] sm:$0xf]
  %v413 = vld [vmem:[%s396 + $0x40] sm:$0xf]
  %v414 = vld [vmem:[%s396 + $0x44] sm:$0xf]
  %v433 = vunpack.c.l.b16 %v397
  %v434 = vunpack.c.l.b16 %v398
  %v435 = vunpack.c.l.b16 %v399
  %v436 = vunpack.c.l.b16 %v400
  %v437 = vunpack.c.l.b16 %v401
  %v438 = vunpack.c.l.b16 %v402
  %v439 = vunpack.c.l.b16 %v403
  %v440 = vunpack.c.l.b16 %v404
  %v441 = vunpack.c.l.b16 %v405
  %v442 = vunpack.c.l.b16 %v406
  %v443 = vunpack.c.l.b16 %v407
  %v444 = vunpack.c.l.b16 %v408
  %v445 = vunpack.c.l.b16 %v409
  %v446 = vunpack.c.l.b16 %v410
  %v447 = vunpack.c.l.b16 %v411
  %v448 = vunpack.c.l.b16 %v412
  %v449 = vunpack.c.l.b16 %v413
  %v450 = vunpack.c.l.b16 %v414
  %v451 = vpack.c.b16 %v434, %v433
  %v452 = vpack.c.b16 %v436, %v435
  %v453 = vpack.c.b16 %v438, %v437
  %v454 = vpack.c.b16 %v440, %v439
  %v455 = vpack.c.b16 %v442, %v441
  %v456 = vpack.c.b16 %v444, %v443
  %v457 = vpack.c.b16 %v446, %v445
  %v458 = vpack.c.b16 %v448, %v447
  %v459 = vpack.c.b16 %v450, %v449
  %469 = vmatpush.bf16.msra.mxu0 %v458
  %470 = vmatpush.bf16.msra.mxu0 %v457
  %471 = vmatpush.bf16.msra.mxu0 %v456
  %472 = vmatpush.bf16.msra.mxu0 %v455
  %473 = vmatpush.bf16.msra.mxu0 %v454
  %474 = vmatpush.bf16.msra.mxu0 %v453
  %475 = vmatpush.bf16.msra.mxu0 %v452
  %476 = vmatpush.bf16.msra.mxu0 %v451
  %477 = vmatmul.bf16.gmra.mxu0 %v63
  %v478 = vpop.f32.mrf.mxu0
  %v479 = vadd.f32 %v42, %v478
  %v480 = vpop.f32.mrf.mxu0
  %v481 = vadd.f32 %v47, %v480
  %482 = vmatmul.bf16.gmra.mxu0 %v65
  %v483 = vpop.f32.mrf.mxu0
  %v484 = vadd.f32 %v52, %v483
  %v485 = vpop.f32.mrf.mxu0
  %486 = vdwg.mxu0
  %487 = vmatpush.bf16.msra.mxu0 0
  %488 = vmatpush.bf16.msra.mxu0 0
  %489 = vmatpush.bf16.msra.mxu0 0
  %490 = vmatpush.bf16.msra.mxu0 0
  %491 = vmatpush.bf16.msra.mxu0 0
  %492 = vmatpush.bf16.msra.mxu0 0
  %493 = vmatpush.bf16.msra.mxu0 0
  %494 = vmatpush.bf16.msra.mxu0 %v459
  %495 = vmatmul.bf16.gmra.mxu0 %v125
  %v496 = vpop.f32.mrf.mxu0
  %v497 = vadd.f32 %v479, %v496
  %v498 = vpop.f32.mrf.mxu0
  %v499 = vadd.f32 %v481, %v498
  %500 = vmatmul.bf16.gmra.mxu0 %v128
  %v501 = vpop.f32.mrf.mxu0
  %v502 = vadd.f32 %v484, %v501
  %v503 = vpop.f32.mrf.mxu0
  %504 = vdwg.mxu0
  %v505 = vand.u32 2147483647, %v497
  %v506 = vand.u32 2147483647, %v499
  %v507 = vand.u32 2147483647, %v502
  %v508 = vmax.f32 %v393, %v505
  %v509 = vmax.f32 %v394, %v506
  %v510 = vmax.f32 %v395, %v507
  %v511 = vmax.f32 %v281, %v508
  %v512 = vmax.f32 %v282, %v509
  %v513 = vmax.f32 %v283, %v510
  %v514 = vpack.c.bf16 %v511, %v511
  %v515 = vpack.c.bf16 %v512, %v512
  %v516 = vpack.c.bf16 %v513, %v513
  %517 = vst [vmem:[%s3] sm:$0xf] %v514
  %518 = vst [vmem:[%s3 + $0x4] sm:$0xf] %v515
  %519 = vst [vmem:[%s3 + $0x8] sm:$0xf] %v516
  // Predicated region
  $region14: #{net1_activate_forward.4} parent=0 // pred_check
    _
  $region15: #{net1_activate_forward.4} parent=0 // pred_check_branch
    %521 = sbr.rel (0) target = $region17
  $region16: #{net1_activate_forward.4} parent=0 // pred_region
    _
  $region17: #{net1_activate_forward.4} parent=0 // pred_fallthru
    _
  // Predicated region
  $region18: #{net1_activate_forward.4} parent=0 // pred_check
    _
  $region19: #{net1_activate_forward.4} parent=0 // pred_check_branch
    %523 = sbr.rel (0) target = $region21
  $region20: #{net1_activate_forward.4} parent=0 // pred_region
    _
  $region21: #{net1_activate_forward.4} parent=0 // pred_fallthru
    _

// kernel: net1_activate_forward.5
$region0: #{net1_activate_forward.5}
  #allocation0 [shape = 'u32[]', space=smem, size = 0x4, offset = 0x4, fixed_abs, tag = 'smem constant byte address 0x4 - core index']
  #allocation1 [shape = 'u32[72,128]{1,0:T(1,128)}', space=vmem, size = 0x9000, scoped, tag = 'internal scratch']
  %s0 = inlined_call_operand.vmem [shape: bf16[4,216,128], index: 0, kind: input, shape index: {}]
  %s1 = inlined_call_operand.vmem [shape: bf16[32,216], index: 1, kind: input, shape index: {}]
  %s2 = inlined_call_operand.vmem [shape: f32[32,1], index: 2, kind: input, shape index: {}]
  %s3 = inlined_call_operand.vmem [shape: bf16[16,32], index: 3, kind: input, shape index: {}]
  %s4 = inlined_call_operand.vmem [shape: f32[16,1], index: 4, kind: input, shape index: {}]
  %s5 = inlined_call_operand.vmem [shape: f32[16,128], index: 5, kind: output, shape index: {}]
  %s6 = sld [smem:[#allocation0]]
  $region30: #{net1_activate_forward.5} parent=0
    _
  %s8 = ssub.s32 1, %s6
  %s9 = scalar_select 0, %s8, %s6
  // Predicated region
  $region2: #{net1_activate_forward.5} parent=0 // pred_check
    _
  $region3: #{net1_activate_forward.5} parent=0 // pred_check_branch
    %11 = sbr.rel (0) target = $region5
  $region4: #{net1_activate_forward.5} parent=0 // pred_region
    _
  $region5: #{net1_activate_forward.5} parent=0 // pred_fallthru
    _
  // Predicated region
  $region6: #{net1_activate_forward.5} parent=0 // pred_check
    _
  $region7: #{net1_activate_forward.5} parent=0 // pred_check_branch
    %13 = sbr.rel (0) target = $region9
  $region8: #{net1_activate_forward.5} parent=0 // pred_region
    _
  $region9: #{net1_activate_forward.5} parent=0 // pred_fallthru
    _
  // Predicated region
  $region10: #{net1_activate_forward.5} parent=0 // pred_check
    _
  $region11: #{net1_activate_forward.5} parent=0 // pred_check_branch
    %15 = sbr.rel (0) target = $region13
  $region12: #{net1_activate_forward.5} parent=0 // pred_region
    _
  $region13: #{net1_activate_forward.5} parent=0 // pred_fallthru
    _
  // Predicated region
  $region14: #{net1_activate_forward.5} parent=0 // pred_check
    _
  $region15: #{net1_activate_forward.5} parent=0 // pred_check_branch
    %17 = sbr.rel (0) target = $region17
  $region16: #{net1_activate_forward.5} parent=0 // pred_region
    _
  $region17: #{net1_activate_forward.5} parent=0 // pred_fallthru
    _
  // Predicated region
  $region18: #{net1_activate_forward.5} parent=0 // pred_check
    _
  $region19: #{net1_activate_forward.5} parent=0 // pred_check_branch
    %19 = sbr.rel (0) target = $region21
  $region20: #{net1_activate_forward.5} parent=0 // pred_region
    _
  $region21: #{net1_activate_forward.5} parent=0 // pred_fallthru
    _
  %v21 = vld [vmem:[%s1] sm:$0xff]
  %v22 = vld [vmem:[%s1 + $0x8] sm:$0xff]
  %v23 = vld [vmem:[%s1 + $0x10] sm:$0xff]
  %v24 = vld [vmem:[%s1 + $0x18] sm:$0xff]
  %v25 = vld [vmem:[%s2] sm:$0xff]
  %v26 = vld [vmem:[%s2 + $0x8] sm:$0xff]
  %v27 = vld [vmem:[%s2 + $0x10] sm:$0xff]
  %v28 = vld [vmem:[%s2 + $0x18] sm:$0xff]
  %v29 = vld [vmem:[%s0] sm:$0xf]
  %v30 = vld [vmem:[%s0 + $0x4] sm:$0xf]
  %v31 = vld [vmem:[%s0 + $0x8] sm:$0xf]
  %v32 = vld [vmem:[%s0 + $0xc] sm:$0xf]
  %v33 = vld [vmem:[%s0 + $0x10] sm:$0xf]
  %v34 = vld [vmem:[%s0 + $0x14] sm:$0xf]
  %v35 = vld [vmem:[%s0 + $0x18] sm:$0xf]
  %v36 = vld [vmem:[%s0 + $0x1c] sm:$0xf]
  %v37 = vld [vmem:[%s0 + $0x20] sm:$0xf]
  %v38 = vld [vmem:[%s0 + $0x24] sm:$0xf]
  %v39 = vld [vmem:[%s0 + $0x28] sm:$0xf]
  %v40 = vld [vmem:[%s0 + $0x2c] sm:$0xf]
  %v41 = vld [vmem:[%s0 + $0x30] sm:$0xf]
  %v42 = vld [vmem:[%s0 + $0x34] sm:$0xf]
  %v43 = vld [vmem:[%s0 + $0x38] sm:$0xf]
  %v44 = vld [vmem:[%s0 + $0x3c] sm:$0xf]
  %v45 = vld [vmem:[%s0 + $0x40] sm:$0xf]
  %v46 = vld [vmem:[%s0 + $0x44] sm:$0xf]
  %v47 = vld [vmem:[%s0 + $0x48] sm:$0xf]
  %v48 = vld [vmem:[%s0 + $0x4c] sm:$0xf]
  %v49 = vld [vmem:[%s0 + $0x50] sm:$0xf]
  %v50 = vld [vmem:[%s0 + $0x54] sm:$0xf]
  %v51 = vld [vmem:[%s0 + $0x58] sm:$0xf]
  %v52 = vld [vmem:[%s0 + $0x5c] sm:$0xf]
  %v53 = vld [vmem:[%s0 + $0x60] sm:$0xf]
  %v54 = vld [vmem:[%s0 + $0x64] sm:$0xf]
  %v55 = vld [vmem:[%s0 + $0x68] sm:$0xf]
  %57 = vset.pattern.permute.xlu0 0
  %58 = vperm.xlu0 %57, %v25
  %v59 = vpop.permute.xlu0 %58
  %62 = vset.pattern.permute.xlu0 0
  %63 = vperm.xlu0 %62, %v26
  %v64 = vpop.permute.xlu0 %63
  %67 = vset.pattern.permute.xlu0 0
  %68 = vperm.xlu0 %67, %v27
  %v69 = vpop.permute.xlu0 %68
  %72 = vset.pattern.permute.xlu0 0
  %73 = vperm.xlu0 %72, %v28
  %v74 = vpop.permute.xlu0 %73
  %v80 = vunpack.c.l.b16 %v21
  %v81 = vunpack.c.h.b16 %v21
  %v82 = vunpack.c.l.b16 %v22
  %v83 = vunpack.c.h.b16 %v22
  %v84 = vunpack.c.l.b16 %v23
  %v85 = vunpack.c.h.b16 %v23
  %v86 = vunpack.c.l.b16 %v24
  %v87 = vunpack.c.h.b16 %v24
  %v88 = vpack.c.b16 %v82, %v80
  %v89 = vpack.c.b16 %v83, %v81
  %v90 = vpack.c.b16 %v86, %v84
  %v91 = vpack.c.b16 %v87, %v85
  %v121 = vunpack.c.l.b16 %v29
  %v122 = vunpack.c.l.b16 %v30
  %v123 = vunpack.c.l.b16 %v31
  %v124 = vunpack.c.l.b16 %v32
  %v125 = vunpack.c.l.b16 %v33
  %v126 = vunpack.c.l.b16 %v34
  %v127 = vunpack.c.l.b16 %v35
  %v128 = vunpack.c.l.b16 %v36
  %v129 = vunpack.c.l.b16 %v37
  %v130 = vunpack.c.l.b16 %v38
  %v131 = vunpack.c.l.b16 %v39
  %v132 = vunpack.c.l.b16 %v40
  %v133 = vunpack.c.l.b16 %v41
  %v134 = vunpack.c.l.b16 %v42
  %v135 = vunpack.c.l.b16 %v43
  %v136 = vunpack.c.l.b16 %v44
  %v137 = vunpack.c.l.b16 %v45
  %v138 = vunpack.c.l.b16 %v46
  %v139 = vunpack.c.l.b16 %v47
  %v140 = vunpack.c.l.b16 %v48
  %v141 = vunpack.c.l.b16 %v49
  %v142 = vunpack.c.l.b16 %v50
  %v143 = vunpack.c.l.b16 %v51
  %v144 = vunpack.c.l.b16 %v52
  %v145 = vunpack.c.l.b16 %v53
  %v146 = vunpack.c.l.b16 %v54
  %v147 = vunpack.c.l.b16 %v55
  %v148 = vpack.c.b16 %v122, %v121
  %v149 = vpack.c.b16 %v124, %v123
  %v150 = vpack.c.b16 %v126, %v125
  %v151 = vpack.c.b16 %v128, %v127
  %v152 = vpack.c.b16 %v130, %v129
  %v153 = vpack.c.b16 %v132, %v131
  %v154 = vpack.c.b16 %v134, %v133
  %v155 = vpack.c.b16 %v136, %v135
  %v156 = vpack.c.b16 %v138, %v137
  %v157 = vpack.c.b16 %v140, %v139
  %v158 = vpack.c.b16 %v142, %v141
  %v159 = vpack.c.b16 %v144, %v143
  %v160 = vpack.c.b16 %v146, %v145
  %v161 = vpack.c.b16 %v147, %v147
  %vm175 = vcmask 719872
  %v177 = vsel %vm175, %v89, 0
  %v180 = vsel %vm175, %v91, 0
  %vm182 = vcmask 1043456
  %v184 = vsel %vm182, %v161, 0
  %186 = vmatpush.bf16.msra.mxu0 %v155
  %187 = vmatpush.bf16.msra.mxu0 %v154
  %188 = vmatpush.bf16.msra.mxu0 %v153
  %189 = vmatpush.bf16.msra.mxu0 %v152
  %190 = vmatpush.bf16.msra.mxu0 %v151
  %191 = vmatpush.bf16.msra.mxu0 %v150
  %192 = vmatpush.bf16.msra.mxu0 %v149
  %193 = vmatpush.bf16.msra.mxu0 %v148
  %194 = vmatmul.bf16.gmra.mxu0 %v88
  %v195 = vpop.f32.mrf.mxu0
  %v196 = vadd.f32 %v59, %v195
  %v197 = vpop.f32.mrf.mxu0
  %v198 = vadd.f32 %v64, %v197
  %199 = vmatmul.bf16.gmra.mxu0 %v90
  %v200 = vpop.f32.mrf.mxu0
  %v201 = vadd.f32 %v69, %v200
  %v202 = vpop.f32.mrf.mxu0
  %v203 = vadd.f32 %v74, %v202
  %204 = vdwg.mxu0
  %205 = vmatpush.bf16.msra.mxu0 0
  %206 = vmatpush.bf16.msra.mxu0 0
  %207 = vmatpush.bf16.msra.mxu0 %v184
  %208 = vmatpush.bf16.msra.mxu0 %v160
  %209 = vmatpush.bf16.msra.mxu0 %v159
  %210 = vmatpush.bf16.msra.mxu0 %v158
  %211 = vmatpush.bf16.msra.mxu0 %v157
  %212 = vmatpush.bf16.msra.mxu0 %v156
  %213 = vmatmul.bf16.gmra.mxu0 %v177
  %v214 = vpop.f32.mrf.mxu0
  %v215 = vadd.f32 %v196, %v214
  %v216 = vpop.f32.mrf.mxu0
  %v217 = vadd.f32 %v198, %v216
  %218 = vmatmul.bf16.gmra.mxu0 %v180
  %v219 = vpop.f32.mrf.mxu0
  %v220 = vadd.f32 %v201, %v219
  %v221 = vpop.f32.mrf.mxu0
  %v222 = vadd.f32 %v203, %v221
  %223 = vdwg.mxu0
  %v224 = vand.u32 2147483647, %v215
  %v225 = vand.u32 2147483647, %v217
  %v226 = vand.u32 2147483647, %v220
  %v227 = vand.u32 2147483647, %v222
  %s228 = scalar_lea.vmem %s0, 108
  %v229 = vld [vmem:[%s228] sm:$0xf]
  %v230 = vld [vmem:[%s228 + $0x4] sm:$0xf]
  %v231 = vld [vmem:[%s228 + $0x8] sm:$0xf]
  %v232 = vld [vmem:[%s228 + $0xc] sm:$0xf]
  %v233 = vld [vmem:[%s228 + $0x10] sm:$0xf]
  %v234 = vld [vmem:[%s228 + $0x14] sm:$0xf]
  %v235 = vld [vmem:[%s228 + $0x18] sm:$0xf]
  %v236 = vld [vmem:[%s228 + $0x1c] sm:$0xf]
  %v237 = vld [vmem:[%s228 + $0x20] sm:$0xf]
  %v238 = vld [vmem:[%s228 + $0x24] sm:$0xf]
  %v239 = vld [vmem:[%s228 + $0x28] sm:$0xf]
  %v240 = vld [vmem:[%s228 + $0x2c] sm:$0xf]
  %v241 = vld [vmem:[%s228 + $0x30] sm:$0xf]
  %v242 = vld [vmem:[%s228 + $0x34] sm:$0xf]
  %v243 = vld [vmem:[%s228 + $0x38] sm:$0xf]
  %v244 = vld [vmem:[%s228 + $0x3c] sm:$0xf]
  %v245 = vld [vmem:[%s228 + $0x40] sm:$0xf]
  %v246 = vld [vmem:[%s228 + $0x44] sm:$0xf]
  %v247 = vld [vmem:[%s228 + $0x48] sm:$0xf]
  %v248 = vld [vmem:[%s228 + $0x4c] sm:$0xf]
  %v249 = vld [vmem:[%s228 + $0x50] sm:$0xf]
  %v250 = vld [vmem:[%s228 + $0x54] sm:$0xf]
  %v251 = vld [vmem:[%s228 + $0x58] sm:$0xf]
  %v252 = vld [vmem:[%s228 + $0x5c] sm:$0xf]
  %v253 = vld [vmem:[%s228 + $0x60] sm:$0xf]
  %v254 = vld [vmem:[%s228 + $0x64] sm:$0xf]
  %v255 = vld [vmem:[%s228 + $0x68] sm:$0xf]
  %v283 = vunpack.c.l.b16 %v229
  %v284 = vunpack.c.l.b16 %v230
  %v285 = vunpack.c.l.b16 %v231
  %v286 = vunpack.c.l.b16 %v232
  %v287 = vunpack.c.l.b16 %v233
  %v288 = vunpack.c.l.b16 %v234
  %v289 = vunpack.c.l.b16 %v235
  %v290 = vunpack.c.l.b16 %v236
  %v291 = vunpack.c.l.b16 %v237
  %v292 = vunpack.c.l.b16 %v238
  %v293 = vunpack.c.l.b16 %v239
  %v294 = vunpack.c.l.b16 %v240
  %v295 = vunpack.c.l.b16 %v241
  %v296 = vunpack.c.l.b16 %v242
  %v297 = vunpack.c.l.b16 %v243
  %v298 = vunpack.c.l.b16 %v244
  %v299 = vunpack.c.l.b16 %v245
  %v300 = vunpack.c.l.b16 %v246
  %v301 = vunpack.c.l.b16 %v247
  %v302 = vunpack.c.l.b16 %v248
  %v303 = vunpack.c.l.b16 %v249
  %v304 = vunpack.c.l.b16 %v250
  %v305 = vunpack.c.l.b16 %v251
  %v306 = vunpack.c.l.b16 %v252
  %v307 = vunpack.c.l.b16 %v253
  %v308 = vunpack.c.l.b16 %v254
  %v309 = vunpack.c.l.b16 %v255
  %v310 = vpack.c.b16 %v284, %v283
  %v311 = vpack.c.b16 %v286, %v285
  %v312 = vpack.c.b16 %v288, %v287
  %v313 = vpack.c.b16 %v290, %v289
  %v314 = vpack.c.b16 %v292, %v291
  %v315 = vpack.c.b16 %v294, %v293
  %v316 = vpack.c.b16 %v296, %v295
  %v317 = vpack.c.b16 %v298, %v297
  %v318 = vpack.c.b16 %v300, %v299
  %v319 = vpack.c.b16 %v302, %v301
  %v320 = vpack.c.b16 %v304, %v303
  %v321 = vpack.c.b16 %v306, %v305
  %v322 = vpack.c.b16 %v308, %v307
  %v323 = vpack.c.b16 %v309, %v309
  %v338 = vsel %vm182, %v323, 0
  %340 = vmatpush.bf16.msra.mxu0 %v317
  %341 = vmatpush.bf16.msra.mxu0 %v316
  %342 = vmatpush.bf16.msra.mxu0 %v315
  %343 = vmatpush.bf16.msra.mxu0 %v314
  %344 = vmatpush.bf16.msra.mxu0 %v313
  %345 = vmatpush.bf16.msra.mxu0 %v312
  %346 = vmatpush.bf16.msra.mxu0 %v311
  %347 = vmatpush.bf16.msra.mxu0 %v310
  %348 = vmatmul.bf16.gmra.mxu0 %v88
  %v349 = vpop.f32.mrf.mxu0
  %v350 = vadd.f32 %v59, %v349
  %v351 = vpop.f32.mrf.mxu0
  %v352 = vadd.f32 %v64, %v351
  %353 = vmatmul.bf16.gmra.mxu0 %v90
  %v354 = vpop.f32.mrf.mxu0
  %v355 = vadd.f32 %v69, %v354
  %v356 = vpop.f32.mrf.mxu0
  %v357 = vadd.f32 %v74, %v356
  %358 = vdwg.mxu0
  %359 = vmatpush.bf16.msra.mxu0 0
  %360 = vmatpush.bf16.msra.mxu0 0
  %361 = vmatpush.bf16.msra.mxu0 %v338
  %362 = vmatpush.bf16.msra.mxu0 %v322
  %363 = vmatpush.bf16.msra.mxu0 %v321
  %364 = vmatpush.bf16.msra.mxu0 %v320
  %365 = vmatpush.bf16.msra.mxu0 %v319
  %366 = vmatpush.bf16.msra.mxu0 %v318
  %367 = vmatmul.bf16.gmra.mxu0 %v177
  %v368 = vpop.f32.mrf.mxu0
  %v369 = vadd.f32 %v350, %v368
  %v370 = vpop.f32.mrf.mxu0
  %v371 = vadd.f32 %v352, %v370
  %372 = vmatmul.bf16.gmra.mxu0 %v180
  %v373 = vpop.f32.mrf.mxu0
  %v374 = vadd.f32 %v355, %v373
  %v375 = vpop.f32.mrf.mxu0
  %v376 = vadd.f32 %v357, %v375
  %377 = vdwg.mxu0
  %v378 = vand.u32 2147483647, %v369
  %v379 = vand.u32 2147483647, %v371
  %v380 = vand.u32 2147483647, %v374
  %v381 = vand.u32 2147483647, %v376
  %v382 = vmax.f32 %v224, %v378
  %v383 = vmax.f32 %v225, %v379
  %v384 = vmax.f32 %v226, %v380
  %v385 = vmax.f32 %v227, %v381
  %s386 = scalar_lea.vmem %s0, 216
  %v387 = vld [vmem:[%s386] sm:$0xf]
  %v388 = vld [vmem:[%s386 + $0x4] sm:$0xf]
  %v389 = vld [vmem:[%s386 + $0x8] sm:$0xf]
  %v390 = vld [vmem:[%s386 + $0xc] sm:$0xf]
  %v391 = vld [vmem:[%s386 + $0x10] sm:$0xf]
  %v392 = vld [vmem:[%s386 + $0x14] sm:$0xf]
  %v393 = vld [vmem:[%s386 + $0x18] sm:$0xf]
  %v394 = vld [vmem:[%s386 + $0x1c] sm:$0xf]
  %v395 = vld [vmem:[%s386 + $0x20] sm:$0xf]
  %v396 = vld [vmem:[%s386 + $0x24] sm:$0xf]
  %v397 = vld [vmem:[%s386 + $0x28] sm:$0xf]
  %v398 = vld [vmem:[%s386 + $0x2c] sm:$0xf]
  %v399 = vld [vmem:[%s386 + $0x30] sm:$0xf]
  %v400 = vld [vmem:[%s386 + $0x34] sm:$0xf]
  %v401 = vld [vmem:[%s386 + $0x38] sm:$0xf]
  %v402 = vld [vmem:[%s386 + $0x3c] sm:$0xf]
  %v403 = vld [vmem:[%s386 + $0x40] sm:$0xf]
  %v404 = vld [vmem:[%s386 + $0x44] sm:$0xf]
  %v405 = vld [vmem:[%s386 + $0x48] sm:$0xf]
  %v406 = vld [vmem:[%s386 + $0x4c] sm:$0xf]
  %v407 = vld [vmem:[%s386 + $0x50] sm:$0xf]
  %v408 = vld [vmem:[%s386 + $0x54] sm:$0xf]
  %v409 = vld [vmem:[%s386 + $0x58] sm:$0xf]
  %v410 = vld [vmem:[%s386 + $0x5c] sm:$0xf]
  %v411 = vld [vmem:[%s386 + $0x60] sm:$0xf]
  %v412 = vld [vmem:[%s386 + $0x64] sm:$0xf]
  %v413 = vld [vmem:[%s386 + $0x68] sm:$0xf]
  %v441 = vunpack.c.l.b16 %v387
  %v442 = vunpack.c.l.b16 %v388
  %v443 = vunpack.c.l.b16 %v389
  %v444 = vunpack.c.l.b16 %v390
  %v445 = vunpack.c.l.b16 %v391
  %v446 = vunpack.c.l.b16 %v392
  %v447 = vunpack.c.l.b16 %v393
  %v448 = vunpack.c.l.b16 %v394
  %v449 = vunpack.c.l.b16 %v395
  %v450 = vunpack.c.l.b16 %v396
  %v451 = vunpack.c.l.b16 %v397
  %v452 = vunpack.c.l.b16 %v398
  %v453 = vunpack.c.l.b16 %v399
  %v454 = vunpack.c.l.b16 %v400
  %v455 = vunpack.c.l.b16 %v401
  %v456 = vunpack.c.l.b16 %v402
  %v457 = vunpack.c.l.b16 %v403
  %v458 = vunpack.c.l.b16 %v404
  %v459 = vunpack.c.l.b16 %v405
  %v460 = vunpack.c.l.b16 %v406
  %v461 = vunpack.c.l.b16 %v407
  %v462 = vunpack.c.l.b16 %v408
  %v463 = vunpack.c.l.b16 %v409
  %v464 = vunpack.c.l.b16 %v410
  %v465 = vunpack.c.l.b16 %v411
  %v466 = vunpack.c.l.b16 %v412
  %v467 = vunpack.c.l.b16 %v413
  %v468 = vpack.c.b16 %v442, %v441
  %v469 = vpack.c.b16 %v444, %v443
  %v470 = vpack.c.b16 %v446, %v445
  %v471 = vpack.c.b16 %v448, %v447
  %v472 = vpack.c.b16 %v450, %v449
  %v473 = vpack.c.b16 %v452, %v451
  %v474 = vpack.c.b16 %v454, %v453
  %v475 = vpack.c.b16 %v456, %v455
  %v476 = vpack.c.b16 %v458, %v457
  %v477 = vpack.c.b16 %v460, %v459
  %v478 = vpack.c.b16 %v462, %v461
  %v479 = vpack.c.b16 %v464, %v463
  %v480 = vpack.c.b16 %v466, %v465
  %v481 = vpack.c.b16 %v467, %v467
  %v496 = vsel %vm182, %v481, 0
  %498 = vmatpush.bf16.msra.mxu0 %v475
  %499 = vmatpush.bf16.msra.mxu0 %v474
  %500 = vmatpush.bf16.msra.mxu0 %v473
  %501 = vmatpush.bf16.msra.mxu0 %v472
  %502 = vmatpush.bf16.msra.mxu0 %v471
  %503 = vmatpush.bf16.msra.mxu0 %v470
  %504 = vmatpush.bf16.msra.mxu0 %v469
  %505 = vmatpush.bf16.msra.mxu0 %v468
  %506 = vmatmul.bf16.gmra.mxu0 %v88
  %v507 = vpop.f32.mrf.mxu0
  %v508 = vadd.f32 %v59, %v507
  %v509 = vpop.f32.mrf.mxu0
  %v510 = vadd.f32 %v64, %v509
  %511 = vmatmul.bf16.gmra.mxu0 %v90
  %v512 = vpop.f32.mrf.mxu0
  %v513 = vadd.f32 %v69, %v512
  %v514 = vpop.f32.mrf.mxu0
  %v515 = vadd.f32 %v74, %v514
  %516 = vdwg.mxu0
  %517 = vmatpush.bf16.msra.mxu0 0
  %518 = vmatpush.bf16.msra.mxu0 0
  %519 = vmatpush.bf16.msra.mxu0 %v496
  %520 = vmatpush.bf16.msra.mxu0 %v480
  %521 = vmatpush.bf16.msra.mxu0 %v479
  %522 = vmatpush.bf16.msra.mxu0 %v478
  %523 = vmatpush.bf16.msra.mxu0 %v477
  %524 = vmatpush.bf16.msra.mxu0 %v476
  %525 = vmatmul.bf16.gmra.mxu0 %v177
  %v526 = vpop.f32.mrf.mxu0
  %v527 = vadd.f32 %v508, %v526
  %v528 = vpop.f32.mrf.mxu0
  %v529 = vadd.f32 %v510, %v528
  %530 = vmatmul.bf16.gmra.mxu0 %v180
  %v531 = vpop.f32.mrf.mxu0
  %v532 = vadd.f32 %v513, %v531
  %v533 = vpop.f32.mrf.mxu0
  %v534 = vadd.f32 %v515, %v533
  %535 = vdwg.mxu0
  %v536 = vand.u32 2147483647, %v527
  %v537 = vand.u32 2147483647, %v529
  %v538 = vand.u32 2147483647, %v532
  %v539 = vand.u32 2147483647, %v534
  %s540 = scalar_lea.vmem %s0, 324
  %v541 = vld [vmem:[%s540] sm:$0xf]
  %v542 = vld [vmem:[%s540 + $0x4] sm:$0xf]
  %v543 = vld [vmem:[%s540 + $0x8] sm:$0xf]
  %v544 = vld [vmem:[%s540 + $0xc] sm:$0xf]
  %v545 = vld [vmem:[%s540 + $0x10] sm:$0xf]
  %v546 = vld [vmem:[%s540 + $0x14] sm:$0xf]
  %v547 = vld [vmem:[%s540 + $0x18] sm:$0xf]
  %v548 = vld [vmem:[%s540 + $0x1c] sm:$0xf]
  %v549 = vld [vmem:[%s540 + $0x20] sm:$0xf]
  %v550 = vld [vmem:[%s540 + $0x24] sm:$0xf]
  %v551 = vld [vmem:[%s540 + $0x28] sm:$0xf]
  %v552 = vld [vmem:[%s540 + $0x2c] sm:$0xf]
  %v553 = vld [vmem:[%s540 + $0x30] sm:$0xf]
  %v554 = vld [vmem:[%s540 + $0x34] sm:$0xf]
  %v555 = vld [vmem:[%s540 + $0x38] sm:$0xf]
  %v556 = vld [vmem:[%s540 + $0x3c] sm:$0xf]
  %v557 = vld [vmem:[%s540 + $0x40] sm:$0xf]
  %v558 = vld [vmem:[%s540 + $0x44] sm:$0xf]
  %v559 = vld [vmem:[%s540 + $0x48] sm:$0xf]
  %v560 = vld [vmem:[%s540 + $0x4c] sm:$0xf]
  %v561 = vld [vmem:[%s540 + $0x50] sm:$0xf]
  %v562 = vld [vmem:[%s540 + $0x54] sm:$0xf]
  %v563 = vld [vmem:[%s540 + $0x58] sm:$0xf]
  %v564 = vld [vmem:[%s540 + $0x5c] sm:$0xf]
  %v565 = vld [vmem:[%s540 + $0x60] sm:$0xf]
  %v566 = vld [vmem:[%s540 + $0x64] sm:$0xf]
  %v567 = vld [vmem:[%s540 + $0x68] sm:$0xf]
  %v595 = vunpack.c.l.b16 %v541
  %v596 = vunpack.c.l.b16 %v542
  %v597 = vunpack.c.l.b16 %v543
  %v598 = vunpack.c.l.b16 %v544
  %v599 = vunpack.c.l.b16 %v545
  %v600 = vunpack.c.l.b16 %v546
  %v601 = vunpack.c.l.b16 %v547
  %v602 = vunpack.c.l.b16 %v548
  %v603 = vunpack.c.l.b16 %v549
  %v604 = vunpack.c.l.b16 %v550
  %v605 = vunpack.c.l.b16 %v551
  %v606 = vunpack.c.l.b16 %v552
  %v607 = vunpack.c.l.b16 %v553
  %v608 = vunpack.c.l.b16 %v554
  %v609 = vunpack.c.l.b16 %v555
  %v610 = vunpack.c.l.b16 %v556
  %v611 = vunpack.c.l.b16 %v557
  %v612 = vunpack.c.l.b16 %v558
  %v613 = vunpack.c.l.b16 %v559
  %v614 = vunpack.c.l.b16 %v560
  %v615 = vunpack.c.l.b16 %v561
  %v616 = vunpack.c.l.b16 %v562
  %v617 = vunpack.c.l.b16 %v563
  %v618 = vunpack.c.l.b16 %v564
  %v619 = vunpack.c.l.b16 %v565
  %v620 = vunpack.c.l.b16 %v566
  %v621 = vunpack.c.l.b16 %v567
  %v622 = vpack.c.b16 %v596, %v595
  %v623 = vpack.c.b16 %v598, %v597
  %v624 = vpack.c.b16 %v600, %v599
  %v625 = vpack.c.b16 %v602, %v601
  %v626 = vpack.c.b16 %v604, %v603
  %v627 = vpack.c.b16 %v606, %v605
  %v628 = vpack.c.b16 %v608, %v607
  %v629 = vpack.c.b16 %v610, %v609
  %v630 = vpack.c.b16 %v612, %v611
  %v631 = vpack.c.b16 %v614, %v613
  %v632 = vpack.c.b16 %v616, %v615
  %v633 = vpack.c.b16 %v618, %v617
  %v634 = vpack.c.b16 %v620, %v619
  %v635 = vpack.c.b16 %v621, %v621
  %v650 = vsel %vm182, %v635, 0
  %652 = vmatpush.bf16.msra.mxu0 %v629
  %653 = vmatpush.bf16.msra.mxu0 %v628
  %654 = vmatpush.bf16.msra.mxu0 %v627
  %655 = vmatpush.bf16.msra.mxu0 %v626
  %656 = vmatpush.bf16.msra.mxu0 %v625
  %657 = vmatpush.bf16.msra.mxu0 %v624
  %658 = vmatpush.bf16.msra.mxu0 %v623
  %659 = vmatpush.bf16.msra.mxu0 %v622
  %660 = vmatmul.bf16.gmra.mxu0 %v88
  %v661 = vpop.f32.mrf.mxu0
  %v662 = vadd.f32 %v59, %v661
  %v663 = vpop.f32.mrf.mxu0
  %v664 = vadd.f32 %v64, %v663
  %665 = vmatmul.bf16.gmra.mxu0 %v90
  %v666 = vpop.f32.mrf.mxu0
  %v667 = vadd.f32 %v69, %v666
  %v668 = vpop.f32.mrf.mxu0
  %v669 = vadd.f32 %v74, %v668
  %670 = vdwg.mxu0
  %671 = vmatpush.bf16.msra.mxu0 0
  %672 = vmatpush.bf16.msra.mxu0 0
  %673 = vmatpush.bf16.msra.mxu0 %v650
  %674 = vmatpush.bf16.msra.mxu0 %v634
  %675 = vmatpush.bf16.msra.mxu0 %v633
  %676 = vmatpush.bf16.msra.mxu0 %v632
  %677 = vmatpush.bf16.msra.mxu0 %v631
  %678 = vmatpush.bf16.msra.mxu0 %v630
  %679 = vmatmul.bf16.gmra.mxu0 %v177
  %v680 = vpop.f32.mrf.mxu0
  %v681 = vadd.f32 %v662, %v680
  %v682 = vpop.f32.mrf.mxu0
  %v683 = vadd.f32 %v664, %v682
  %684 = vmatmul.bf16.gmra.mxu0 %v180
  %v685 = vpop.f32.mrf.mxu0
  %v686 = vadd.f32 %v667, %v685
  %v687 = vpop.f32.mrf.mxu0
  %v688 = vadd.f32 %v669, %v687
  %689 = vdwg.mxu0
  %v690 = vand.u32 2147483647, %v681
  %v691 = vand.u32 2147483647, %v683
  %v692 = vand.u32 2147483647, %v686
  %v693 = vand.u32 2147483647, %v688
  %v694 = vmax.f32 %v536, %v690
  %v695 = vmax.f32 %v537, %v691
  %v696 = vmax.f32 %v538, %v692
  %v697 = vmax.f32 %v539, %v693
  %v698 = vmax.f32 %v382, %v694
  %v699 = vmax.f32 %v383, %v695
  %v700 = vmax.f32 %v384, %v696
  %v701 = vmax.f32 %v385, %v697
  %v702 = vld [vmem:[%s3] sm:$0xf]
  %v703 = vld [vmem:[%s3 + $0x4] sm:$0xf]
  %v704 = vpack.c.bf16 %v699, %v698
  %v705 = vpack.c.bf16 %v701, %v700
  %v706 = vld [vmem:[%s4] sm:$0xff]
  %v707 = vld [vmem:[%s4 + $0x8] sm:$0xff]
  %709 = vset.pattern.permute.xlu0 0
  %710 = vperm.xlu0 %709, %v706
  %v711 = vpop.permute.xlu0 %710
  %714 = vset.pattern.permute.xlu0 0
  %715 = vperm.xlu0 %714, %v707
  %v716 = vpop.permute.xlu0 %715
  %v720 = vunpack.c.l.b16 %v702
  %v721 = vunpack.c.l.b16 %v703
  %v722 = vpack.c.b16 %v721, %v720
  %vm723 = vcmask 261120
  %v725 = vsel %vm723, %v722, 0
  %727 = vmatpush.bf16.msra.mxu0 0
  %728 = vmatpush.bf16.msra.mxu0 0
  %729 = vmatpush.bf16.msra.mxu0 0
  %730 = vmatpush.bf16.msra.mxu0 0
  %731 = vmatpush.bf16.msra.mxu0 0
  %732 = vmatpush.bf16.msra.mxu0 0
  %733 = vmatpush.bf16.msra.mxu0 %v705
  %734 = vmatpush.bf16.msra.mxu0 %v704
  %735 = vmatmul.bf16.gmra.mxu0 %v725
  %v736 = vpop.f32.mrf.mxu0
  %v737 = vadd.f32 %v711, %v736
  %v738 = vpop.f32.mrf.mxu0
  %v739 = vadd.f32 %v716, %v738
  %740 = vdwg.mxu0
  %741 = vst [vmem:[%s5] sm:$0xff] %v737
  %742 = vst [vmem:[%s5 + $0x8] sm:$0xff] %v739
  // Predicated region
  $region22: #{net1_activate_forward.5} parent=0 // pred_check
    _
  $region23: #{net1_activate_forward.5} parent=0 // pred_check_branch
    %744 = sbr.rel (0) target = $region25
  $region24: #{net1_activate_forward.5} parent=0 // pred_region
    _
  $region25: #{net1_activate_forward.5} parent=0 // pred_fallthru
    _
  // Predicated region
  $region26: #{net1_activate_forward.5} parent=0 // pred_check
    _
  $region27: #{net1_activate_forward.5} parent=0 // pred_check_branch
    %746 = sbr.rel (0) target = $region29
  $region28: #{net1_activate_forward.5} parent=0 // pred_region
    _
  $region29: #{net1_activate_forward.5} parent=0 // pred_fallthru
    _

</llo_original>
